<compile_context>
chip_gen: v6e
topology: v6e:2x2x1
jax: 0.10.0
libtpu: 0.0.40
codegen_flags: <defaults>
</compile_context>

<pallas_src>
import functools

import jax
import jax.numpy as jnp
from jax.experimental import pallas as pl
from jax.experimental.pallas import tpu as pltpu


ENC_CHANNELS = (8, 16, 16, 24, 24, 32)   # six encoder levels; feats[5] feeds the ConvLSTM
ENC_SUM = sum(ENC_CHANNELS)              # 120


def _round_up(x, m):
    return (x + m - 1) // m * m


def _sigmoid_via_tanh(x):
    # sigmoid(x) == 0.5 * (1 + tanh(0.5 x)); tanh is a single EUP push.
    return 0.5 * (1.0 + jnp.tanh(0.5 * x))


# ----------------------------------------------------------------------------
# Fused per-(pixel-tile, time-step) kernel
# ----------------------------------------------------------------------------
def _fused_lstm_kernel(init_ref, x_ref,
                       w_init_ref, b_init_ref,
                       w_enc_ref, b_enc_ref,
                       w_gx_ref, w_gh_ref, b_g_ref,
                       w_decf_ref, w_dech_ref, b_dec_ref,
                       w_head_ref, b_head_ref,
                       out_ref, h_sc, c_sc, *, ch, cf):
    """Initializer (t==0) + encoder + ConvLSTM + decoder + head, fully fused.

    Layout: channels on sublanes, pixels on lanes -> (channels, tm) tiles, so
    all stores are lane-dense.  h (bf16) / c (f32) persist in VMEM scratch
    across the inner ("arbitrary") time axis.  No in-kernel concatenations:
    gate / decoder weights are pre-split so each contribution is its own dot.
    """
    t = pl.program_id(1)

    # --- initializer: c0,h0 = tanh(W_init @ cat(first_image, masks) + b) -----
    @pl.when(t == 0)
    def _():
        init_out = jnp.tanh(
            jnp.dot(w_init_ref[...], init_ref[...],
                    preferred_element_type=jnp.float32) + b_init_ref[...])
        c_sc[...] = init_out[:ch, :]                       # cell state in f32
        h_sc[...] = init_out[ch:, :].astype(jnp.bfloat16)  # hidden in bf16

    x = x_ref[0]                                           # (C, tm) bf16

    # --- encoder: six 1x1 convs fused into one (120, C) @ (C, tm) ------------
    # Row order: [ConvLSTM feature block (cf rows) | decoder blocks (88 rows)]
    # so the two slices below are 16-row aligned for bf16 packing.
    feats = jnp.maximum(
        jnp.dot(w_enc_ref[...], x, preferred_element_type=jnp.float32)
        + b_enc_ref[...], 0.0).astype(jnp.bfloat16)        # (120, tm) bf16 ONCE

    fv = feats[:cf, :]                                     # feats[5], (cf, tm)
    feats_dec = feats[cf:, :]                              # feats[0:5], (88, tm)
    h_prev = h_sc[...]                                     # (ch, tm) bf16

    # --- decoder(feats) half: depends only on feats, issue before the gating
    #     chain so the MXU overlaps the EUP/VPU gate work --------------------
    dec_feats = jnp.dot(w_decf_ref[...], feats_dec,
                        preferred_element_type=jnp.float32)   # (dec, tm) f32

    # --- ConvLSTM cell: split gate matmuls, no concat -----------------------
    gates = (jnp.dot(w_gx_ref[...], fv, preferred_element_type=jnp.float32)
             + jnp.dot(w_gh_ref[...], h_prev, preferred_element_type=jnp.float32)
             + b_g_ref[...])                               # (4*ch, tm) f32
    i_g = _sigmoid_via_tanh(gates[0 * ch:1 * ch, :])       # 32-row slices, aligned
    f_g = _sigmoid_via_tanh(gates[1 * ch:2 * ch, :])
    g_g = jnp.tanh(gates[2 * ch:3 * ch, :])
    o_g = _sigmoid_via_tanh(gates[3 * ch:4 * ch, :])
    c_next = f_g * c_sc[...] + i_g * g_g                   # state math in f32
    h_next = o_g * jnp.tanh(c_next)
    c_sc[...] = c_next
    h_next_bf = h_next.astype(jnp.bfloat16)
    h_sc[...] = h_next_bf

    # --- decoder(h_next) half + head -----------------------------------------
    dec_out = jnp.maximum(
        dec_feats
        + jnp.dot(w_dech_ref[...], h_next_bf, preferred_element_type=jnp.float32)
        + b_dec_ref[...], 0.0).astype(jnp.bfloat16)        # (dec, tm)
    logit = (jnp.dot(w_head_ref[...], dec_out,
                     preferred_element_type=jnp.float32)
             + b_head_ref[...])                            # (num_classes, tm)
    out_ref[0] = logit.astype(out_ref.dtype)               # bf16, lane-dense


# ----------------------------------------------------------------------------
# Deterministic parameter construction (synthetic submodules)
# ----------------------------------------------------------------------------
def init_params(key, c_img=3, s_mask=1, ch_lstm=32, dec_channels=32,
                num_classes=2):
    ks = list(jax.random.split(key, 12))
    scale = 0.1

    def w(k, shape):
        return scale * jax.random.normal(k, shape, jnp.float32)

    params = {"ch_lstm": ch_lstm, "num_classes": num_classes}
    # initializer: 1x1 conv (C+S) -> 2*Ch, tanh; split into (c0, h0)
    params["w_init"] = w(ks[0], (c_img + s_mask, 2 * ch_lstm))
    params["b_init"] = jnp.zeros((2 * ch_lstm,), jnp.float32)
    # encoder: six parallel 1x1 convs C -> ENC_CHANNELS[k], relu
    params["encoder"] = [
        (w(ks[1 + lvl], (c_img, cout)), jnp.zeros((cout,), jnp.float32))
        for lvl, cout in enumerate(ENC_CHANNELS)]
    # convlstm: gate convs (1x1) for x and h
    cf = ENC_CHANNELS[5]
    params["wx"] = w(ks[7], (cf, 4 * ch_lstm))
    params["wh"] = w(ks[8], (ch_lstm, 4 * ch_lstm))
    params["b_lstm"] = jnp.zeros((4 * ch_lstm,), jnp.float32)
    # decoder: concat(feats[0:5], h) -> dec_channels, relu
    cin_dec = sum(ENC_CHANNELS[:5]) + ch_lstm
    params["w_dec"] = w(ks[9], (cin_dec, dec_channels))
    params["b_dec"] = jnp.zeros((dec_channels,), jnp.float32)
    # head: dec_channels -> num_classes (logits)
    params["w_head"] = w(ks[10], (dec_channels, num_classes))
    params["b_head"] = jnp.zeros((num_classes,), jnp.float32)
    return params


def _pack_weights(params):
    """Transpose to (N_out, K) for the pixels-on-lane layout.

    * six encoder convs fused into one weight, with the ConvLSTM feature block
      (level 5, cf rows) placed FIRST so in-kernel slices are 16-row aligned,
    * gate weights kept split (wx / wh) — no in-kernel concat,
    * decoder weight split into its feats[0:5] half and its h half,
    * matmul operands in bf16, biases in f32 column vectors.
    """
    cf = ENC_CHANNELS[5]
    n_dec_feats = sum(ENC_CHANNELS[:5])                                # 88

    w_init_t = params["w_init"].T.astype(jnp.bfloat16)                 # (2ch, C+S)
    b_init = params["b_init"].reshape(-1, 1)

    enc_ws = [wk for wk, _ in params["encoder"]]
    enc_bs = [bk for _, bk in params["encoder"]]
    order = (5, 0, 1, 2, 3, 4)                                         # cf block first
    w_enc = jnp.concatenate([enc_ws[k] for k in order], axis=1)
    b_enc = jnp.concatenate([enc_bs[k] for k in order], axis=0)
    w_enc_t = w_enc.T.astype(jnp.bfloat16)                             # (120, C)
    b_enc = b_enc.reshape(-1, 1)

    w_gx_t = params["wx"].T.astype(jnp.bfloat16)                       # (4ch, cf)
    w_gh_t = params["wh"].T.astype(jnp.bfloat16)                       # (4ch, ch)
    b_g = params["b_lstm"].reshape(-1, 1)

    w_decf_t = params["w_dec"][:n_dec_feats].T.astype(jnp.bfloat16)    # (dec, 88)
    w_dech_t = params["w_dec"][n_dec_feats:].T.astype(jnp.bfloat16)    # (dec, ch)
    b_dec = params["b_dec"].reshape(-1, 1)

    w_head_t = params["w_head"].T.astype(jnp.bfloat16)                 # (nc, dec)
    b_head = params["b_head"].reshape(-1, 1)
    return (w_init_t, b_init, w_enc_t, b_enc, w_gx_t, w_gh_t, b_g,
            w_decf_t, w_dech_t, b_dec, w_head_t, b_head)


# ----------------------------------------------------------------------------
# Forward pass (mirrors LSTMModel.forward)
# ----------------------------------------------------------------------------
def lstm_model_forward(params, images, masks, tm=8192):
    # images: (B, T, C, H, W) NCHW frames; masks: (B, S, H, W)
    if images.ndim != 5:
        images = images[None]
    if masks.ndim != 4:
        masks = masks[None]
    B, T, C, H, W = images.shape
    ch = params["ch_lstm"]
    nc = params["num_classes"]
    cf = ENC_CHANNELS[5]
    cs = C + masks.shape[1]

    # TODO(synk): the reference also builds `mask = np.swapaxes(masks[:,0][None],0,1)`
    # but only uses it inside an except-print; omitted here.

    M = B * H * W
    m_lanes = _round_up(M, 128)
    tm = _round_up(max(128, min(tm, m_lanes)), 128)
    # Keep >= 2 pixel tiles so the "parallel" axis can megacore-shard on v7x
    # (one tile would idle a whole TensorCore there).
    if m_lanes >= 256 and m_lanes // tm < 2:
        tm = _round_up(-(-m_lanes // 2), 128)
    m_pad = _round_up(M, tm)

    # Hoisted layout change (once, outside the time loop):
    # pixels-on-lane: activations are (channels, B*H*W).
    init_in = jnp.concatenate([images[:, 0], masks], axis=1)           # (B, C+S, H, W)
    init_in = jnp.transpose(init_in, (1, 0, 2, 3)).reshape(cs, M)
    frames = jnp.transpose(images[:, 1:], (1, 2, 0, 3, 4)).reshape(T - 1, C, M)
    if m_pad != M:
        init_in = jnp.pad(init_in, ((0, 0), (0, m_pad - M)))
        frames = jnp.pad(frames, ((0, 0), (0, 0), (0, m_pad - M)))
    init_in = init_in.astype(jnp.bfloat16)
    frames = frames.astype(jnp.bfloat16)

    (w_init_t, b_init, w_enc_t, b_enc, w_gx_t, w_gh_t, b_g,
     w_decf_t, w_dech_t, b_dec, w_head_t, b_head) = _pack_weights(params)

    grid = (m_pad // tm, T - 1)              # pixel tiles parallel, time arbitrary

    def full(a):  # tiny VMEM-resident weight/bias: whole array, constant index
        return pl.BlockSpec(a.shape, lambda i, t, _nd=a.ndim: (0,) * _nd)

    out = pl.pallas_call(
        functools.partial(_fused_lstm_kernel, ch=ch, cf=cf),
        out_shape=jax.ShapeDtypeStruct((T - 1, nc, m_pad), jnp.bfloat16),
        grid=grid,
        in_specs=[
            pl.BlockSpec((cs, tm), lambda i, t: (0, i)),           # init_in
            pl.BlockSpec((1, C, tm), lambda i, t: (t, 0, i)),      # frames
            full(w_init_t), full(b_init),
            full(w_enc_t), full(b_enc),
            full(w_gx_t), full(w_gh_t), full(b_g),
            full(w_decf_t), full(w_dech_t), full(b_dec),
            full(w_head_t), full(b_head),
        ],
        out_specs=pl.BlockSpec((1, nc, tm), lambda i, t: (t, 0, i)),
        scratch_shapes=[pltpu.VMEM((ch, tm), jnp.bfloat16),        # h state (bf16)
                        pltpu.VMEM((ch, tm), jnp.float32)],        # c state (f32)
        compiler_params=pltpu.CompilerParams(
            dimension_semantics=("parallel", "arbitrary"),
            vmem_limit_bytes=48 * 1024 * 1024),
    )(init_in, frames, w_init_t, b_init, w_enc_t, b_enc,
      w_gx_t, w_gh_t, b_g, w_decf_t, w_dech_t, b_dec, w_head_t, b_head)

    # (T-1, nc, M) -> (B, num_classes, T-1, H, W)   [stack(dim=1).transpose(2,1)]
    out = out[:, :, :M].reshape(T - 1, nc, B, H, W)
    return jnp.transpose(out, (2, 1, 0, 3, 4)).astype(jnp.float32)


# ----------------------------------------------------------------------------
if __name__ == "__main__":
    key = jax.random.PRNGKey(0)
    k_img, k_mask, k_par = jax.random.split(key, 3)

    B, T, C, H, W, S = 2, 4, 3, 16, 16, 1
    images = jax.random.normal(k_img, (B, T, C, H, W), jnp.float32)
    masks = jax.random.normal(k_mask, (B, S, H, W), jnp.float32)

    params = init_params(k_par, c_img=C, s_mask=S, ch_lstm=32,
                         dec_channels=32, num_classes=2)

    fwd = jax.jit(functools.partial(lstm_model_forward, params))
    out = jax.block_until_ready(fwd(images, masks))
    assert out.shape == (B, 2, T - 1, H, W), out.shape
    assert bool(jnp.all(jnp.isfinite(out)))
    print("KERNEL_OK")
</pallas_src>

<mosaic_0001>
module attributes {stable_mosaic.version = 11 : i64} {
  func.func @_fused_lstm_kernel(%arg0: i32, %arg1: i32, %arg2: memref<4x256xbf16, #tpu.memory_space<vmem>>, %arg3: memref<1x3x256xbf16, #tpu.memory_space<vmem>>, %arg4: memref<64x4xbf16, #tpu.memory_space<vmem>>, %arg5: memref<64x1xf32, #tpu.memory_space<vmem>>, %arg6: memref<120x3xbf16, #tpu.memory_space<vmem>>, %arg7: memref<120x1xf32, #tpu.memory_space<vmem>>, %arg8: memref<128x32xbf16, #tpu.memory_space<vmem>>, %arg9: memref<128x32xbf16, #tpu.memory_space<vmem>>, %arg10: memref<128x1xf32, #tpu.memory_space<vmem>>, %arg11: memref<32x88xbf16, #tpu.memory_space<vmem>>, %arg12: memref<32x32xbf16, #tpu.memory_space<vmem>>, %arg13: memref<32x1xf32, #tpu.memory_space<vmem>>, %arg14: memref<2x32xbf16, #tpu.memory_space<vmem>>, %arg15: memref<2x1xf32, #tpu.memory_space<vmem>>, %arg16: memref<1x2x256xbf16, #tpu.memory_space<vmem>>, %arg17: memref<32x256xbf16, #tpu.memory_space<vmem>>, %arg18: memref<32x256xf32, #tpu.memory_space<vmem>>) attributes {dimension_semantics = [#tpu.dimension_semantics<parallel>, #tpu.dimension_semantics<arbitrary>], iteration_bounds = array<i64: 2, 3>, scalar_prefetch = 0 : i64, scratch_operands = 2 : i64, tpu.core_type = #tpu.core_type<tc>, window_params = [{transform_indices = @transform_0, window_bounds = array<i64: 4, 256>}, {transform_indices = @transform_1, window_bounds = array<i64: 1, 3, 256>}, {pipeline_mode = #tpu.pipeline_mode<synchronous>, transform_indices = @transform_2, window_bounds = array<i64: 64, 4>}, {pipeline_mode = #tpu.pipeline_mode<synchronous>, transform_indices = @transform_3, window_bounds = array<i64: 64, 1>}, {pipeline_mode = #tpu.pipeline_mode<synchronous>, transform_indices = @transform_4, window_bounds = array<i64: 120, 3>}, {pipeline_mode = #tpu.pipeline_mode<synchronous>, transform_indices = @transform_5, window_bounds = array<i64: 120, 1>}, {pipeline_mode = #tpu.pipeline_mode<synchronous>, transform_indices = @transform_6, window_bounds = array<i64: 128, 32>}, {pipeline_mode = #tpu.pipeline_mode<synchronous>, transform_indices = @transform_7, window_bounds = array<i64: 128, 32>}, {pipeline_mode = #tpu.pipeline_mode<synchronous>, transform_indices = @transform_8, window_bounds = array<i64: 128, 1>}, {pipeline_mode = #tpu.pipeline_mode<synchronous>, transform_indices = @transform_9, window_bounds = array<i64: 32, 88>}, {pipeline_mode = #tpu.pipeline_mode<synchronous>, transform_indices = @transform_10, window_bounds = array<i64: 32, 32>}, {pipeline_mode = #tpu.pipeline_mode<synchronous>, transform_indices = @transform_11, window_bounds = array<i64: 32, 1>}, {pipeline_mode = #tpu.pipeline_mode<synchronous>, transform_indices = @transform_12, window_bounds = array<i64: 2, 32>}, {pipeline_mode = #tpu.pipeline_mode<synchronous>, transform_indices = @transform_13, window_bounds = array<i64: 2, 1>}, {transform_indices = @transform_14, window_bounds = array<i64: 1, 2, 256>}]} {
    %c0_i32 = arith.constant 0 : i32
    %0 = arith.cmpi eq, %arg1, %c0_i32 : i32
    %1 = arith.extui %0 : i1 to i32
    %c0_i32_0 = arith.constant 0 : i32
    %2 = arith.cmpi ne, %1, %c0_i32_0 : i32
    scf.if %2 {
      %c0_50 = arith.constant 0 : index
      %c0_51 = arith.constant 0 : index
      %79 = vector.load %arg4[%c0_50, %c0_51] : memref<64x4xbf16, #tpu.memory_space<vmem>>, vector<64x4xbf16>
      %c0_52 = arith.constant 0 : index
      %c0_53 = arith.constant 0 : index
      %80 = vector.load %arg2[%c0_52, %c0_53] : memref<4x256xbf16, #tpu.memory_space<vmem>>, vector<4x256xbf16>
      %cst_54 = arith.constant dense<0.000000e+00> : vector<64x256xf32>
      %81 = tpu.matmul %79, %80, %cst_54 {dimension_numbers = #tpu.dot_dimension_numbers<[1], [0], [0], [1], [0, 0, 1, 1], [], []>} : vector<64x4xbf16>, vector<4x256xbf16>, vector<64x256xf32> -> vector<64x256xf32>
      %c0_55 = arith.constant 0 : index
      %c0_56 = arith.constant 0 : index
      %82 = vector.load %arg5[%c0_55, %c0_56] : memref<64x1xf32, #tpu.memory_space<vmem>>, vector<64x1xf32>
      %83 = vector.broadcast %82 : vector<64x1xf32> to vector<64x256xf32>
      %84 = arith.addf %81, %83 : vector<64x256xf32>
      %85 = math.tanh %84 : vector<64x256xf32>
      %86 = vector.extract_strided_slice %85 {offsets = [0, 0], sizes = [32, 256], strides = [1, 1]} : vector<64x256xf32> to vector<32x256xf32>
      %c0_57 = arith.constant 0 : index
      %c0_58 = arith.constant 0 : index
      %87 = vector.load %arg18[%c0_57, %c0_58] : memref<32x256xf32, #tpu.memory_space<vmem>>, vector<32x256xf32>
      tpu.vector_store %arg18[%c0_57, %c0_58], %86 {strides = array<i32>} : memref<32x256xf32, #tpu.memory_space<vmem>>, vector<32x256xf32>,
      %88 = vector.extract_strided_slice %85 {offsets = [32, 0], sizes = [32, 256], strides = [1, 1]} : vector<64x256xf32> to vector<32x256xf32>
      %89 = arith.truncf %88 : vector<32x256xf32> to vector<32x256xbf16>
      %c0_59 = arith.constant 0 : index
      %c0_60 = arith.constant 0 : index
      %90 = vector.load %arg17[%c0_59, %c0_60] : memref<32x256xbf16, #tpu.memory_space<vmem>>, vector<32x256xbf16>
      tpu.vector_store %arg17[%c0_59, %c0_60], %89 {strides = array<i32>} : memref<32x256xbf16, #tpu.memory_space<vmem>>, vector<32x256xbf16>,
    } else {
    }
    %c0 = arith.constant 0 : index
    %c0_1 = arith.constant 0 : index
    %c0_2 = arith.constant 0 : index
    %3 = vector.load %arg3[%c0, %c0_1, %c0_2] : memref<1x3x256xbf16, #tpu.memory_space<vmem>>, vector<1x3x256xbf16>
    %4 = vector.shape_cast %3 : vector<1x3x256xbf16> to vector<3x256xbf16>
    %c0_3 = arith.constant 0 : index
    %c0_4 = arith.constant 0 : index
    %5 = vector.load %arg6[%c0_3, %c0_4] : memref<120x3xbf16, #tpu.memory_space<vmem>>, vector<120x3xbf16>
    %cst = arith.constant dense<0.000000e+00> : vector<120x256xf32>
    %6 = tpu.matmul %5, %4, %cst {dimension_numbers = #tpu.dot_dimension_numbers<[1], [0], [0], [1], [0, 0, 1, 1], [], []>} : vector<120x3xbf16>, vector<3x256xbf16>, vector<120x256xf32> -> vector<120x256xf32>
    %c0_5 = arith.constant 0 : index
    %c0_6 = arith.constant 0 : index
    %7 = vector.load %arg7[%c0_5, %c0_6] : memref<120x1xf32, #tpu.memory_space<vmem>>, vector<120x1xf32>
    %8 = vector.broadcast %7 : vector<120x1xf32> to vector<120x256xf32>
    %9 = arith.addf %6, %8 : vector<120x256xf32>
    %cst_7 = arith.constant 0.000000e+00 : f32
    %10 = vector.broadcast %cst_7 : f32 to vector<120x256xf32>
    %11 = arith.maximumf %9, %10 : vector<120x256xf32>
    %12 = arith.truncf %11 : vector<120x256xf32> to vector<120x256xbf16>
    %13 = vector.extract_strided_slice %12 {offsets = [0, 0], sizes = [32, 256], strides = [1, 1]} : vector<120x256xbf16> to vector<32x256xbf16>
    %14 = vector.extract_strided_slice %12 {offsets = [32, 0], sizes = [88, 256], strides = [1, 1]} : vector<120x256xbf16> to vector<88x256xbf16>
    %c0_8 = arith.constant 0 : index
    %c0_9 = arith.constant 0 : index
    %15 = vector.load %arg17[%c0_8, %c0_9] : memref<32x256xbf16, #tpu.memory_space<vmem>>, vector<32x256xbf16>
    %c0_10 = arith.constant 0 : index
    %c0_11 = arith.constant 0 : index
    %16 = vector.load %arg11[%c0_10, %c0_11] : memref<32x88xbf16, #tpu.memory_space<vmem>>, vector<32x88xbf16>
    %cst_12 = arith.constant dense<0.000000e+00> : vector<32x256xf32>
    %17 = tpu.matmul %16, %14, %cst_12 {dimension_numbers = #tpu.dot_dimension_numbers<[1], [0], [0], [1], [0, 0, 1, 1], [], []>} : vector<32x88xbf16>, vector<88x256xbf16>, vector<32x256xf32> -> vector<32x256xf32>
    %c0_13 = arith.constant 0 : index
    %c0_14 = arith.constant 0 : index
    %18 = vector.load %arg8[%c0_13, %c0_14] : memref<128x32xbf16, #tpu.memory_space<vmem>>, vector<128x32xbf16>
    %cst_15 = arith.constant dense<0.000000e+00> : vector<128x256xf32>
    %19 = tpu.matmul %18, %13, %cst_15 {dimension_numbers = #tpu.dot_dimension_numbers<[1], [0], [0], [1], [0, 0, 1, 1], [], []>} : vector<128x32xbf16>, vector<32x256xbf16>, vector<128x256xf32> -> vector<128x256xf32>
    %c0_16 = arith.constant 0 : index
    %c0_17 = arith.constant 0 : index
    %20 = vector.load %arg9[%c0_16, %c0_17] : memref<128x32xbf16, #tpu.memory_space<vmem>>, vector<128x32xbf16>
    %cst_18 = arith.constant dense<0.000000e+00> : vector<128x256xf32>
    %21 = tpu.matmul %20, %15, %cst_18 {dimension_numbers = #tpu.dot_dimension_numbers<[1], [0], [0], [1], [0, 0, 1, 1], [], []>} : vector<128x32xbf16>, vector<32x256xbf16>, vector<128x256xf32> -> vector<128x256xf32>
    %22 = arith.addf %19, %21 : vector<128x256xf32>
    %c0_19 = arith.constant 0 : index
    %c0_20 = arith.constant 0 : index
    %23 = vector.load %arg10[%c0_19, %c0_20] : memref<128x1xf32, #tpu.memory_space<vmem>>, vector<128x1xf32>
    %24 = vector.broadcast %23 : vector<128x1xf32> to vector<128x256xf32>
    %25 = arith.addf %22, %24 : vector<128x256xf32>
    %26 = vector.extract_strided_slice %25 {offsets = [0, 0], sizes = [32, 256], strides = [1, 1]} : vector<128x256xf32> to vector<32x256xf32>
    %cst_21 = arith.constant 5.000000e-01 : f32
    %27 = vector.broadcast %cst_21 : f32 to vector<32x256xf32>
    %28 = arith.mulf %27, %26 : vector<32x256xf32>
    %29 = math.tanh %28 : vector<32x256xf32>
    %cst_22 = arith.constant 1.000000e+00 : f32
    %30 = vector.broadcast %cst_22 : f32 to vector<32x256xf32>
    %31 = arith.addf %30, %29 : vector<32x256xf32>
    %cst_23 = arith.constant 5.000000e-01 : f32
    %32 = vector.broadcast %cst_23 : f32 to vector<32x256xf32>
    %33 = arith.mulf %32, %31 : vector<32x256xf32>
    %34 = vector.extract_strided_slice %25 {offsets = [32, 0], sizes = [32, 256], strides = [1, 1]} : vector<128x256xf32> to vector<32x256xf32>
    %cst_24 = arith.constant 5.000000e-01 : f32
    %35 = vector.broadcast %cst_24 : f32 to vector<32x256xf32>
    %36 = arith.mulf %35, %34 : vector<32x256xf32>
    %37 = math.tanh %36 : vector<32x256xf32>
    %cst_25 = arith.constant 1.000000e+00 : f32
    %38 = vector.broadcast %cst_25 : f32 to vector<32x256xf32>
    %39 = arith.addf %38, %37 : vector<32x256xf32>
    %cst_26 = arith.constant 5.000000e-01 : f32
    %40 = vector.broadcast %cst_26 : f32 to vector<32x256xf32>
    %41 = arith.mulf %40, %39 : vector<32x256xf32>
    %42 = vector.extract_strided_slice %25 {offsets = [64, 0], sizes = [32, 256], strides = [1, 1]} : vector<128x256xf32> to vector<32x256xf32>
    %43 = math.tanh %42 : vector<32x256xf32>
    %44 = vector.extract_strided_slice %25 {offsets = [96, 0], sizes = [32, 256], strides = [1, 1]} : vector<128x256xf32> to vector<32x256xf32>
    %cst_27 = arith.constant 5.000000e-01 : f32
    %45 = vector.broadcast %cst_27 : f32 to vector<32x256xf32>
    %46 = arith.mulf %45, %44 : vector<32x256xf32>
    %47 = math.tanh %46 : vector<32x256xf32>
    %cst_28 = arith.constant 1.000000e+00 : f32
    %48 = vector.broadcast %cst_28 : f32 to vector<32x256xf32>
    %49 = arith.addf %48, %47 : vector<32x256xf32>
    %cst_29 = arith.constant 5.000000e-01 : f32
    %50 = vector.broadcast %cst_29 : f32 to vector<32x256xf32>
    %51 = arith.mulf %50, %49 : vector<32x256xf32>
    %c0_30 = arith.constant 0 : index
    %c0_31 = arith.constant 0 : index
    %52 = vector.load %arg18[%c0_30, %c0_31] : memref<32x256xf32, #tpu.memory_space<vmem>>, vector<32x256xf32>
    %53 = arith.mulf %41, %52 : vector<32x256xf32>
    %54 = arith.mulf %33, %43 : vector<32x256xf32>
    %55 = arith.addf %53, %54 : vector<32x256xf32>
    %56 = math.tanh %55 : vector<32x256xf32>
    %57 = arith.mulf %51, %56 : vector<32x256xf32>
    %c0_32 = arith.constant 0 : index
    %c0_33 = arith.constant 0 : index
    %58 = vector.load %arg18[%c0_32, %c0_33] : memref<32x256xf32, #tpu.memory_space<vmem>>, vector<32x256xf32>
    tpu.vector_store %arg18[%c0_32, %c0_33], %55 {strides = array<i32>} : memref<32x256xf32, #tpu.memory_space<vmem>>, vector<32x256xf32>,
    %59 = arith.truncf %57 : vector<32x256xf32> to vector<32x256xbf16>
    %c0_34 = arith.constant 0 : index
    %c0_35 = arith.constant 0 : index
    %60 = vector.load %arg17[%c0_34, %c0_35] : memref<32x256xbf16, #tpu.memory_space<vmem>>, vector<32x256xbf16>
    tpu.vector_store %arg17[%c0_34, %c0_35], %59 {strides = array<i32>} : memref<32x256xbf16, #tpu.memory_space<vmem>>, vector<32x256xbf16>,
    %c0_36 = arith.constant 0 : index
    %c0_37 = arith.constant 0 : index
    %61 = vector.load %arg12[%c0_36, %c0_37] : memref<32x32xbf16, #tpu.memory_space<vmem>>, vector<32x32xbf16>
    %cst_38 = arith.constant dense<0.000000e+00> : vector<32x256xf32>
    %62 = tpu.matmul %61, %59, %cst_38 {dimension_numbers = #tpu.dot_dimension_numbers<[1], [0], [0], [1], [0, 0, 1, 1], [], []>} : vector<32x32xbf16>, vector<32x256xbf16>, vector<32x256xf32> -> vector<32x256xf32>
    %63 = arith.addf %17, %62 : vector<32x256xf32>
    %c0_39 = arith.constant 0 : index
    %c0_40 = arith.constant 0 : index
    %64 = vector.load %arg13[%c0_39, %c0_40] : memref<32x1xf32, #tpu.memory_space<vmem>>, vector<32x1xf32>
    %65 = vector.broadcast %64 : vector<32x1xf32> to vector<32x256xf32>
    %66 = arith.addf %63, %65 : vector<32x256xf32>
    %cst_41 = arith.constant 0.000000e+00 : f32
    %67 = vector.broadcast %cst_41 : f32 to vector<32x256xf32>
    %68 = arith.maximumf %66, %67 : vector<32x256xf32>
    %69 = arith.truncf %68 : vector<32x256xf32> to vector<32x256xbf16>
    %c0_42 = arith.constant 0 : index
    %c0_43 = arith.constant 0 : index
    %70 = vector.load %arg14[%c0_42, %c0_43] : memref<2x32xbf16, #tpu.memory_space<vmem>>, vector<2x32xbf16>
    %cst_44 = arith.constant dense<0.000000e+00> : vector<2x256xf32>
    %71 = tpu.matmul %70, %69, %cst_44 {dimension_numbers = #tpu.dot_dimension_numbers<[1], [0], [0], [1], [0, 0, 1, 1], [], []>} : vector<2x32xbf16>, vector<32x256xbf16>, vector<2x256xf32> -> vector<2x256xf32>
    %c0_45 = arith.constant 0 : index
    %c0_46 = arith.constant 0 : index
    %72 = vector.load %arg15[%c0_45, %c0_46] : memref<2x1xf32, #tpu.memory_space<vmem>>, vector<2x1xf32>
    %73 = vector.broadcast %72 : vector<2x1xf32> to vector<2x256xf32>
    %74 = arith.addf %71, %73 : vector<2x256xf32>
    %75 = arith.truncf %74 : vector<2x256xf32> to vector<2x256xbf16>
    %c0_47 = arith.constant 0 : index
    %c0_48 = arith.constant 0 : index
    %c0_49 = arith.constant 0 : index
    %76 = vector.load %arg16[%c0_47, %c0_48, %c0_49] : memref<1x2x256xbf16, #tpu.memory_space<vmem>>, vector<1x2x256xbf16>
    %77 = vector.shape_cast %76 : vector<1x2x256xbf16> to vector<2x256xbf16>
    %78 = vector.shape_cast %75 : vector<2x256xbf16> to vector<1x2x256xbf16>
    tpu.vector_store %arg16[%c0_47, %c0_48, %c0_49], %78 {strides = array<i32>} : memref<1x2x256xbf16, #tpu.memory_space<vmem>>, vector<1x2x256xbf16>,
    return
  }
  func.func @transform_0(%arg0: i32, %arg1: i32) -> (i32, i32) {
    %c0_i32 = arith.constant 0 : i32
    %c0_i32_0 = arith.constant 0 : i32
    return %c0_i32, %arg0 : i32, i32
  }
  func.func @transform_1(%arg0: i32, %arg1: i32) -> (i32, i32, i32) {
    %c0_i32 = arith.constant 0 : i32
    %c0_i32_0 = arith.constant 0 : i32
    return %arg1, %c0_i32, %arg0 : i32, i32, i32
  }
  func.func @transform_2(%arg0: i32, %arg1: i32) -> (i32, i32) {
    %c0_i32 = arith.constant 0 : i32
    %c0_i32_0 = arith.constant 0 : i32
    %c0_i32_1 = arith.constant 0 : i32
    return %c0_i32, %c0_i32_0 : i32, i32
  }
  func.func @transform_3(%arg0: i32, %arg1: i32) -> (i32, i32) {
    %c0_i32 = arith.constant 0 : i32
    %c0_i32_0 = arith.constant 0 : i32
    %c0_i32_1 = arith.constant 0 : i32
    return %c0_i32, %c0_i32_0 : i32, i32
  }
  func.func @transform_4(%arg0: i32, %arg1: i32) -> (i32, i32) {
    %c0_i32 = arith.constant 0 : i32
    %c0_i32_0 = arith.constant 0 : i32
    %c0_i32_1 = arith.constant 0 : i32
    return %c0_i32, %c0_i32_0 : i32, i32
  }
  func.func @transform_5(%arg0: i32, %arg1: i32) -> (i32, i32) {
    %c0_i32 = arith.constant 0 : i32
    %c0_i32_0 = arith.constant 0 : i32
    %c0_i32_1 = arith.constant 0 : i32
    return %c0_i32, %c0_i32_0 : i32, i32
  }
  func.func @transform_6(%arg0: i32, %arg1: i32) -> (i32, i32) {
    %c0_i32 = arith.constant 0 : i32
    %c0_i32_0 = arith.constant 0 : i32
    %c0_i32_1 = arith.constant 0 : i32
    return %c0_i32, %c0_i32_0 : i32, i32
  }
  func.func @transform_7(%arg0: i32, %arg1: i32) -> (i32, i32) {
    %c0_i32 = arith.constant 0 : i32
    %c0_i32_0 = arith.constant 0 : i32
    %c0_i32_1 = arith.constant 0 : i32
    return %c0_i32, %c0_i32_0 : i32, i32
  }
  func.func @transform_8(%arg0: i32, %arg1: i32) -> (i32, i32) {
    %c0_i32 = arith.constant 0 : i32
    %c0_i32_0 = arith.constant 0 : i32
    %c0_i32_1 = arith.constant 0 : i32
    return %c0_i32, %c0_i32_0 : i32, i32
  }
  func.func @transform_9(%arg0: i32, %arg1: i32) -> (i32, i32) {
    %c0_i32 = arith.constant 0 : i32
    %c0_i32_0 = arith.constant 0 : i32
    %c0_i32_1 = arith.constant 0 : i32
    return %c0_i32, %c0_i32_0 : i32, i32
  }
  func.func @transform_10(%arg0: i32, %arg1: i32) -> (i32, i32) {
    %c0_i32 = arith.constant 0 : i32
    %c0_i32_0 = arith.constant 0 : i32
    %c0_i32_1 = arith.constant 0 : i32
    return %c0_i32, %c0_i32_0 : i32, i32
  }
  func.func @transform_11(%arg0: i32, %arg1: i32) -> (i32, i32) {
    %c0_i32 = arith.constant 0 : i32
    %c0_i32_0 = arith.constant 0 : i32
    %c0_i32_1 = arith.constant 0 : i32
    return %c0_i32, %c0_i32_0 : i32, i32
  }
  func.func @transform_12(%arg0: i32, %arg1: i32) -> (i32, i32) {
    %c0_i32 = arith.constant 0 : i32
    %c0_i32_0 = arith.constant 0 : i32
    %c0_i32_1 = arith.constant 0 : i32
    return %c0_i32, %c0_i32_0 : i32, i32
  }
  func.func @transform_13(%arg0: i32, %arg1: i32) -> (i32, i32) {
    %c0_i32 = arith.constant 0 : i32
    %c0_i32_0 = arith.constant 0 : i32
    %c0_i32_1 = arith.constant 0 : i32
    return %c0_i32, %c0_i32_0 : i32, i32
  }
  func.func @transform_14(%arg0: i32, %arg1: i32) -> (i32, i32, i32) {
    %c0_i32 = arith.constant 0 : i32
    %c0_i32_0 = arith.constant 0 : i32
    return %arg1, %c0_i32, %arg0 : i32, i32, i32
  }
}

</mosaic_0001>

<llo_original>
// kernel: lstm_model_forward.1
$region0: #{lstm_model_forward.1}
  #allocation0 [shape = 'u32[]', space=smem, size = 0x4, offset = 0x4, fixed_abs, tag = 'smem constant byte address 0x4 - core index']
  #allocation1 [shape = 'u32[144,128]{1,0:T(1,128)}', space=vmem, size = 0x12000, scoped, tag = 'internal scratch']
  #allocation2 [shape = 'bf16[32,256]{1,0:T(8,128)(2,1)}', space=vmem, size = 0x4000, scoped, tag = 'scratch operand']
  #allocation3 [shape = 'f32[32,256]{1,0:T(8,128)}', space=vmem, size = 0x8000, scoped, tag = 'scratch operand']
  %s0 = inlined_call_operand.vmem [shape: bf16[4,512], index: 0, kind: input, shape index: {}]
  %s1 = inlined_call_operand.vmem [shape: bf16[3,3,512], index: 1, kind: input, shape index: {}]
  %s2 = inlined_call_operand.vmem [shape: bf16[64,4], index: 2, kind: input, shape index: {}]
  %s3 = inlined_call_operand.vmem [shape: f32[64,1], index: 3, kind: input, shape index: {}]
  %s4 = inlined_call_operand.vmem [shape: bf16[120,3], index: 4, kind: input, shape index: {}]
  %s5 = inlined_call_operand.vmem [shape: f32[120,1], index: 5, kind: input, shape index: {}]
  %s6 = inlined_call_operand.vmem [shape: bf16[128,32], index: 6, kind: input, shape index: {}]
  %s7 = inlined_call_operand.vmem [shape: bf16[128,32], index: 7, kind: input, shape index: {}]
  %s8 = inlined_call_operand.vmem [shape: f32[128,1], index: 8, kind: input, shape index: {}]
  %s9 = inlined_call_operand.vmem [shape: bf16[32,88], index: 9, kind: input, shape index: {}]
  %s10 = inlined_call_operand.vmem [shape: bf16[32,32], index: 10, kind: input, shape index: {}]
  %s11 = inlined_call_operand.vmem [shape: f32[32,1], index: 11, kind: input, shape index: {}]
  %s12 = inlined_call_operand.vmem [shape: bf16[2,32], index: 12, kind: input, shape index: {}]
  %s13 = inlined_call_operand.vmem [shape: f32[2,1], index: 13, kind: input, shape index: {}]
  %s14 = inlined_call_operand.vmem [shape: bf16[3,2,512], index: 14, kind: output, shape index: {}]
  %s15 = sld [smem:[#allocation0]]
  $region93: #{lstm_model_forward.1} parent=0
    _
  %s17 = ssub.s32 1, %s15
  %s18 = scalar_select 0, %s17, %s15
  loop: start=0, step=1, limit=8
  $region2: #{lstm_model_forward.1} parent=0 // loop_pre_header
    _
  $region3: #{lstm_model_forward.1} parent=0 // loop_header
    %s20 = sphi 0, %s24
    %p21 = scmp.ge.s32.totalorder %s20, 8
    %s27 = sphi 0, %s39
    %s28 = sphi 0, %s35
    %s29 = sphi 0, %s27
    %s30 = sphi 0, %s28
    %s31 = sphi 0, %s29
    %s32 = sphi 0, %s30
    %s42 = sphi 0, %s44
    %s45 = sphi 0, %s42
    %s46 = sphi 0, %s45
    %s62 = sphi 0, %s46
    %s70 = sphi 0, %s72
    %s73 = sphi 0, %s70
    %s74 = sphi 0, %s73
    %s90 = sphi 0, %s74
    %s94 = sphi 0, %s94
    %s96 = sphi 0, %s94
    %s97 = sphi 0, %s96
    %s111 = sphi 0, %s97
    %s115 = sphi 0, %s115
    %s117 = sphi 0, %s115
    %s118 = sphi 0, %s117
    %s132 = sphi 0, %s118
    %s136 = sphi 0, %s136
    %s138 = sphi 0, %s136
    %s139 = sphi 0, %s138
    %s153 = sphi 0, %s139
    %s157 = sphi 0, %s157
    %s159 = sphi 0, %s157
    %s160 = sphi 0, %s159
    %s174 = sphi 0, %s160
    %s178 = sphi 0, %s178
    %s180 = sphi 0, %s178
    %s181 = sphi 0, %s180
    %s195 = sphi 0, %s181
    %s199 = sphi 0, %s199
    %s201 = sphi 0, %s199
    %s202 = sphi 0, %s201
    %s216 = sphi 0, %s202
    %s220 = sphi 0, %s220
    %s222 = sphi 0, %s220
    %s223 = sphi 0, %s222
    %s237 = sphi 0, %s223
    %s241 = sphi 0, %s241
    %s243 = sphi 0, %s241
    %s244 = sphi 0, %s243
    %s258 = sphi 0, %s244
    %s262 = sphi 0, %s262
    %s264 = sphi 0, %s262
    %s265 = sphi 0, %s264
    %s279 = sphi 0, %s265
    %s283 = sphi 0, %s283
    %s285 = sphi 0, %s283
    %s286 = sphi 0, %s285
    %s300 = sphi 0, %s286
    %s304 = sphi 0, %s304
    %s306 = sphi 0, %s304
    %s307 = sphi 0, %s306
    %s321 = sphi 0, %s307
    %s325 = sphi 0, %s325
    %s327 = sphi 0, %s325
    %s328 = sphi 0, %s327
    %s342 = sphi 0, %s328
    %s350 = sphi 0, %s352
    %s353 = sphi 0, %s350
    %s354 = sphi 0, %s353
    %s370 = sphi 0, %s354
  $region4: #{lstm_model_forward.1} parent=0 // loop_header_branch
    %23 = sbr.rel (%p21) target = $region8
  $region5: #{lstm_model_forward.1} parent=0 // loop_body
    %s25 = ssub.s32 %s20, 1
    %s26 = ssub.s32 %s20, 2
    %s33 = sadd.s32 1, %s28
    %p34 = scmp.ge.s32.totalorder %s33, 3
    %s35 = scalar_select %p34, 0, %s33
    %s36 = sadd.s32 1, %s27
    %s37 = scalar_select %p34, %s36, %s27
    %p38 = scmp.ge.s32.totalorder %s37, 2
    %s39 = scalar_select %p38, 0, %s37
    %s40 = ssub.s32 %s27, %s39
    %p41 = scmp.eq.s32.totalorder %s40, 0
    %s43 = sadd.s32 %s42, 1
    %s44 = scalar_select %p41, %s42, %s43
    %p47 = pneg %p41
    %p48 = scmp.eq.s32.totalorder %s20, 5
    %p49 = por %p47, %p48
    %p50 = scmp.ne.s32.totalorder %s42, %s45
    %p51 = scmp.eq.s32.totalorder %s20, 0
    %p52 = por %p50, %p51
    %p53 = scmp.ne.s32.totalorder %s42, %s45
    %p54 = scmp.eq.s32.totalorder %s25, 5
    %p55 = por %p53, %p54
    %p56 = scmp.ne.s32.totalorder %s45, %s46
    %p57 = scmp.eq.s32.totalorder %s25, 0
    %p58 = por %p56, %p57
    %p59 = scmp.ne.s32.totalorder %s45, %s46
    %p60 = scmp.eq.s32.totalorder %s26, 5
    %p61 = por %p59, %p60
    %p63 = scmp.ne.s32.totalorder %s46, %s62
    %p64 = scmp.eq.s32.totalorder %s26, 0
    %p65 = por %p63, %p64
    %s66 = ssub.s32 %s28, %s35
    %s67 = ssub.s32 %s27, %s39
    %s68 = sor.u32 %s66, %s67
    %p69 = scmp.eq.s32.totalorder %s68, 0
    %s71 = sadd.s32 %s70, 1
    %s72 = scalar_select %p69, %s70, %s71
    %p75 = pneg %p69
    %p76 = scmp.eq.s32.totalorder %s20, 5
    %p77 = por %p75, %p76
    %p78 = scmp.ne.s32.totalorder %s70, %s73
    %p79 = scmp.eq.s32.totalorder %s20, 0
    %p80 = por %p78, %p79
    %p81 = scmp.ne.s32.totalorder %s70, %s73
    %p82 = scmp.eq.s32.totalorder %s25, 5
    %p83 = por %p81, %p82
    %p84 = scmp.ne.s32.totalorder %s73, %s74
    %p85 = scmp.eq.s32.totalorder %s25, 0
    %p86 = por %p84, %p85
    %p87 = scmp.ne.s32.totalorder %s73, %s74
    %p88 = scmp.eq.s32.totalorder %s26, 5
    %p89 = por %p87, %p88
    %p91 = scmp.ne.s32.totalorder %s74, %s90
    %p92 = scmp.eq.s32.totalorder %s26, 0
    %p93 = por %p91, %p92
    %s95 = sadd.s32 %s94, 1
    %p98 = scmp.eq.s32.totalorder %s20, 5
    %p99 = scmp.ne.s32.totalorder %s94, %s96
    %p100 = scmp.eq.s32.totalorder %s20, 0
    %p101 = por %p99, %p100
    %p102 = scmp.ne.s32.totalorder %s94, %s96
    %p103 = scmp.eq.s32.totalorder %s25, 5
    %p104 = por %p102, %p103
    %p105 = scmp.ne.s32.totalorder %s96, %s97
    %p106 = scmp.eq.s32.totalorder %s25, 0
    %p107 = por %p105, %p106
    %p108 = scmp.ne.s32.totalorder %s96, %s97
    %p109 = scmp.eq.s32.totalorder %s26, 5
    %p110 = por %p108, %p109
    %p112 = scmp.ne.s32.totalorder %s97, %s111
    %p113 = scmp.eq.s32.totalorder %s26, 0
    %p114 = por %p112, %p113
    %s116 = sadd.s32 %s115, 1
    %p119 = scmp.eq.s32.totalorder %s20, 5
    %p120 = scmp.ne.s32.totalorder %s115, %s117
    %p121 = scmp.eq.s32.totalorder %s20, 0
    %p122 = por %p120, %p121
    %p123 = scmp.ne.s32.totalorder %s115, %s117
    %p124 = scmp.eq.s32.totalorder %s25, 5
    %p125 = por %p123, %p124
    %p126 = scmp.ne.s32.totalorder %s117, %s118
    %p127 = scmp.eq.s32.totalorder %s25, 0
    %p128 = por %p126, %p127
    %p129 = scmp.ne.s32.totalorder %s117, %s118
    %p130 = scmp.eq.s32.totalorder %s26, 5
    %p131 = por %p129, %p130
    %p133 = scmp.ne.s32.totalorder %s118, %s132
    %p134 = scmp.eq.s32.totalorder %s26, 0
    %p135 = por %p133, %p134
    %s137 = sadd.s32 %s136, 1
    %p140 = scmp.eq.s32.totalorder %s20, 5
    %p141 = scmp.ne.s32.totalorder %s136, %s138
    %p142 = scmp.eq.s32.totalorder %s20, 0
    %p143 = por %p141, %p142
    %p144 = scmp.ne.s32.totalorder %s136, %s138
    %p145 = scmp.eq.s32.totalorder %s25, 5
    %p146 = por %p144, %p145
    %p147 = scmp.ne.s32.totalorder %s138, %s139
    %p148 = scmp.eq.s32.totalorder %s25, 0
    %p149 = por %p147, %p148
    %p150 = scmp.ne.s32.totalorder %s138, %s139
    %p151 = scmp.eq.s32.totalorder %s26, 5
    %p152 = por %p150, %p151
    %p154 = scmp.ne.s32.totalorder %s139, %s153
    %p155 = scmp.eq.s32.totalorder %s26, 0
    %p156 = por %p154, %p155
    %s158 = sadd.s32 %s157, 1
    %p161 = scmp.eq.s32.totalorder %s20, 5
    %p162 = scmp.ne.s32.totalorder %s157, %s159
    %p163 = scmp.eq.s32.totalorder %s20, 0
    %p164 = por %p162, %p163
    %p165 = scmp.ne.s32.totalorder %s157, %s159
    %p166 = scmp.eq.s32.totalorder %s25, 5
    %p167 = por %p165, %p166
    %p168 = scmp.ne.s32.totalorder %s159, %s160
    %p169 = scmp.eq.s32.totalorder %s25, 0
    %p170 = por %p168, %p169
    %p171 = scmp.ne.s32.totalorder %s159, %s160
    %p172 = scmp.eq.s32.totalorder %s26, 5
    %p173 = por %p171, %p172
    %p175 = scmp.ne.s32.totalorder %s160, %s174
    %p176 = scmp.eq.s32.totalorder %s26, 0
    %p177 = por %p175, %p176
    %s179 = sadd.s32 %s178, 1
    %p182 = scmp.eq.s32.totalorder %s20, 5
    %p183 = scmp.ne.s32.totalorder %s178, %s180
    %p184 = scmp.eq.s32.totalorder %s20, 0
    %p185 = por %p183, %p184
    %p186 = scmp.ne.s32.totalorder %s178, %s180
    %p187 = scmp.eq.s32.totalorder %s25, 5
    %p188 = por %p186, %p187
    %p189 = scmp.ne.s32.totalorder %s180, %s181
    %p190 = scmp.eq.s32.totalorder %s25, 0
    %p191 = por %p189, %p190
    %p192 = scmp.ne.s32.totalorder %s180, %s181
    %p193 = scmp.eq.s32.totalorder %s26, 5
    %p194 = por %p192, %p193
    %p196 = scmp.ne.s32.totalorder %s181, %s195
    %p197 = scmp.eq.s32.totalorder %s26, 0
    %p198 = por %p196, %p197
    %s200 = sadd.s32 %s199, 1
    %p203 = scmp.eq.s32.totalorder %s20, 5
    %p204 = scmp.ne.s32.totalorder %s199, %s201
    %p205 = scmp.eq.s32.totalorder %s20, 0
    %p206 = por %p204, %p205
    %p207 = scmp.ne.s32.totalorder %s199, %s201
    %p208 = scmp.eq.s32.totalorder %s25, 5
    %p209 = por %p207, %p208
    %p210 = scmp.ne.s32.totalorder %s201, %s202
    %p211 = scmp.eq.s32.totalorder %s25, 0
    %p212 = por %p210, %p211
    %p213 = scmp.ne.s32.totalorder %s201, %s202
    %p214 = scmp.eq.s32.totalorder %s26, 5
    %p215 = por %p213, %p214
    %p217 = scmp.ne.s32.totalorder %s202, %s216
    %p218 = scmp.eq.s32.totalorder %s26, 0
    %p219 = por %p217, %p218
    %s221 = sadd.s32 %s220, 1
    %p224 = scmp.eq.s32.totalorder %s20, 5
    %p225 = scmp.ne.s32.totalorder %s220, %s222
    %p226 = scmp.eq.s32.totalorder %s20, 0
    %p227 = por %p225, %p226
    %p228 = scmp.ne.s32.totalorder %s220, %s222
    %p229 = scmp.eq.s32.totalorder %s25, 5
    %p230 = por %p228, %p229
    %p231 = scmp.ne.s32.totalorder %s222, %s223
    %p232 = scmp.eq.s32.totalorder %s25, 0
    %p233 = por %p231, %p232
    %p234 = scmp.ne.s32.totalorder %s222, %s223
    %p235 = scmp.eq.s32.totalorder %s26, 5
    %p236 = por %p234, %p235
    %p238 = scmp.ne.s32.totalorder %s223, %s237
    %p239 = scmp.eq.s32.totalorder %s26, 0
    %p240 = por %p238, %p239
    %s242 = sadd.s32 %s241, 1
    %p245 = scmp.eq.s32.totalorder %s20, 5
    %p246 = scmp.ne.s32.totalorder %s241, %s243
    %p247 = scmp.eq.s32.totalorder %s20, 0
    %p248 = por %p246, %p247
    %p249 = scmp.ne.s32.totalorder %s241, %s243
    %p250 = scmp.eq.s32.totalorder %s25, 5
    %p251 = por %p249, %p250
    %p252 = scmp.ne.s32.totalorder %s243, %s244
    %p253 = scmp.eq.s32.totalorder %s25, 0
    %p254 = por %p252, %p253
    %p255 = scmp.ne.s32.totalorder %s243, %s244
    %p256 = scmp.eq.s32.totalorder %s26, 5
    %p257 = por %p255, %p256
    %p259 = scmp.ne.s32.totalorder %s244, %s258
    %p260 = scmp.eq.s32.totalorder %s26, 0
    %p261 = por %p259, %p260
    %s263 = sadd.s32 %s262, 1
    %p266 = scmp.eq.s32.totalorder %s20, 5
    %p267 = scmp.ne.s32.totalorder %s262, %s264
    %p268 = scmp.eq.s32.totalorder %s20, 0
    %p269 = por %p267, %p268
    %p270 = scmp.ne.s32.totalorder %s262, %s264
    %p271 = scmp.eq.s32.totalorder %s25, 5
    %p272 = por %p270, %p271
    %p273 = scmp.ne.s32.totalorder %s264, %s265
    %p274 = scmp.eq.s32.totalorder %s25, 0
    %p275 = por %p273, %p274
    %p276 = scmp.ne.s32.totalorder %s264, %s265
    %p277 = scmp.eq.s32.totalorder %s26, 5
    %p278 = por %p276, %p277
    %p280 = scmp.ne.s32.totalorder %s265, %s279
    %p281 = scmp.eq.s32.totalorder %s26, 0
    %p282 = por %p280, %p281
    %s284 = sadd.s32 %s283, 1
    %p287 = scmp.eq.s32.totalorder %s20, 5
    %p288 = scmp.ne.s32.totalorder %s283, %s285
    %p289 = scmp.eq.s32.totalorder %s20, 0
    %p290 = por %p288, %p289
    %p291 = scmp.ne.s32.totalorder %s283, %s285
    %p292 = scmp.eq.s32.totalorder %s25, 5
    %p293 = por %p291, %p292
    %p294 = scmp.ne.s32.totalorder %s285, %s286
    %p295 = scmp.eq.s32.totalorder %s25, 0
    %p296 = por %p294, %p295
    %p297 = scmp.ne.s32.totalorder %s285, %s286
    %p298 = scmp.eq.s32.totalorder %s26, 5
    %p299 = por %p297, %p298
    %p301 = scmp.ne.s32.totalorder %s286, %s300
    %p302 = scmp.eq.s32.totalorder %s26, 0
    %p303 = por %p301, %p302
    %s305 = sadd.s32 %s304, 1
    %p308 = scmp.eq.s32.totalorder %s20, 5
    %p309 = scmp.ne.s32.totalorder %s304, %s306
    %p310 = scmp.eq.s32.totalorder %s20, 0
    %p311 = por %p309, %p310
    %p312 = scmp.ne.s32.totalorder %s304, %s306
    %p313 = scmp.eq.s32.totalorder %s25, 5
    %p314 = por %p312, %p313
    %p315 = scmp.ne.s32.totalorder %s306, %s307
    %p316 = scmp.eq.s32.totalorder %s25, 0
    %p317 = por %p315, %p316
    %p318 = scmp.ne.s32.totalorder %s306, %s307
    %p319 = scmp.eq.s32.totalorder %s26, 5
    %p320 = por %p318, %p319
    %p322 = scmp.ne.s32.totalorder %s307, %s321
    %p323 = scmp.eq.s32.totalorder %s26, 0
    %p324 = por %p322, %p323
    %s326 = sadd.s32 %s325, 1
    %p329 = scmp.eq.s32.totalorder %s20, 5
    %p330 = scmp.ne.s32.totalorder %s325, %s327
    %p331 = scmp.eq.s32.totalorder %s20, 0
    %p332 = por %p330, %p331
    %p333 = scmp.ne.s32.totalorder %s325, %s327
    %p334 = scmp.eq.s32.totalorder %s25, 5
    %p335 = por %p333, %p334
    %p336 = scmp.ne.s32.totalorder %s327, %s328
    %p337 = scmp.eq.s32.totalorder %s25, 0
    %p338 = por %p336, %p337
    %p339 = scmp.ne.s32.totalorder %s327, %s328
    %p340 = scmp.eq.s32.totalorder %s26, 5
    %p341 = por %p339, %p340
    %p343 = scmp.ne.s32.totalorder %s328, %s342
    %p344 = scmp.eq.s32.totalorder %s26, 0
    %p345 = por %p343, %p344
    %s346 = ssub.s32 %s28, %s35
    %s347 = ssub.s32 %s27, %s39
    %s348 = sor.u32 %s346, %s347
    %p349 = scmp.eq.s32.totalorder %s348, 0
    %s351 = sadd.s32 %s350, 1
    %s352 = scalar_select %p349, %s350, %s351
    %p355 = pneg %p349
    %p356 = scmp.eq.s32.totalorder %s20, 5
    %p357 = por %p355, %p356
    %p358 = scmp.ne.s32.totalorder %s350, %s353
    %p359 = scmp.eq.s32.totalorder %s20, 0
    %p360 = por %p358, %p359
    %p361 = scmp.ne.s32.totalorder %s350, %s353
    %p362 = scmp.eq.s32.totalorder %s25, 5
    %p363 = por %p361, %p362
    %p364 = scmp.ne.s32.totalorder %s353, %s354
    %p365 = scmp.eq.s32.totalorder %s25, 0
    %p366 = por %p364, %p365
    %p367 = scmp.ne.s32.totalorder %s353, %s354
    %p368 = scmp.eq.s32.totalorder %s26, 5
    %p369 = por %p367, %p368
    %p371 = scmp.ne.s32.totalorder %s354, %s370
    %p372 = scmp.eq.s32.totalorder %s26, 0
    %p373 = por %p371, %p372
    %p374 = scmp.le.s32.totalorder 1, %s20
    %p375 = scmp.lt.s32.totalorder %s20, 7
    %p376 = pnand %p374, %p375
    %p377 = pneg %p376
    // Predicated region
    $region9: #{lstm_model_forward.1} parent=5 // pred_check
      _
    $region10: #{lstm_model_forward.1} parent=5 // pred_check_branch
      %379 = sbr.rel (%p376) target = $region12
    $region11: #{lstm_model_forward.1} parent=5 // pred_region
      %s380 = ssub.s32 %s20, 1
      // Predicated region
      $region13: #{lstm_model_forward.1} parent=11 // pred_check
        %p381 = pneg %p107
      $region14: #{lstm_model_forward.1} parent=11 // pred_check_branch
        %383 = sbr.rel (%p381) target = $region16
      $region15: #{lstm_model_forward.1} parent=11 // pred_region
        _
      $region16: #{lstm_model_forward.1} parent=11 // pred_fallthru
        _
      // Predicated region
      $region17: #{lstm_model_forward.1} parent=11 // pred_check
        %p384 = pneg %p128
      $region18: #{lstm_model_forward.1} parent=11 // pred_check_branch
        %386 = sbr.rel (%p384) target = $region20
      $region19: #{lstm_model_forward.1} parent=11 // pred_region
        _
      $region20: #{lstm_model_forward.1} parent=11 // pred_fallthru
        _
      // Predicated region
      $region21: #{lstm_model_forward.1} parent=11 // pred_check
        %p387 = pneg %p149
      $region22: #{lstm_model_forward.1} parent=11 // pred_check_branch
        %389 = sbr.rel (%p387) target = $region24
      $region23: #{lstm_model_forward.1} parent=11 // pred_region
        _
      $region24: #{lstm_model_forward.1} parent=11 // pred_fallthru
        _
      // Predicated region
      $region25: #{lstm_model_forward.1} parent=11 // pred_check
        %p390 = pneg %p170
      $region26: #{lstm_model_forward.1} parent=11 // pred_check_branch
        %392 = sbr.rel (%p390) target = $region28
      $region27: #{lstm_model_forward.1} parent=11 // pred_region
        _
      $region28: #{lstm_model_forward.1} parent=11 // pred_fallthru
        _
      // Predicated region
      $region29: #{lstm_model_forward.1} parent=11 // pred_check
        %p393 = pneg %p191
      $region30: #{lstm_model_forward.1} parent=11 // pred_check_branch
        %395 = sbr.rel (%p393) target = $region32
      $region31: #{lstm_model_forward.1} parent=11 // pred_region
        _
      $region32: #{lstm_model_forward.1} parent=11 // pred_fallthru
        _
      // Predicated region
      $region33: #{lstm_model_forward.1} parent=11 // pred_check
        %p396 = pneg %p212
      $region34: #{lstm_model_forward.1} parent=11 // pred_check_branch
        %398 = sbr.rel (%p396) target = $region36
      $region35: #{lstm_model_forward.1} parent=11 // pred_region
        _
      $region36: #{lstm_model_forward.1} parent=11 // pred_fallthru
        _
      // Predicated region
      $region37: #{lstm_model_forward.1} parent=11 // pred_check
        %p399 = pneg %p233
      $region38: #{lstm_model_forward.1} parent=11 // pred_check_branch
        %401 = sbr.rel (%p399) target = $region40
      $region39: #{lstm_model_forward.1} parent=11 // pred_region
        _
      $region40: #{lstm_model_forward.1} parent=11 // pred_fallthru
        _
      // Predicated region
      $region41: #{lstm_model_forward.1} parent=11 // pred_check
        %p402 = pneg %p254
      $region42: #{lstm_model_forward.1} parent=11 // pred_check_branch
        %404 = sbr.rel (%p402) target = $region44
      $region43: #{lstm_model_forward.1} parent=11 // pred_region
        _
      $region44: #{lstm_model_forward.1} parent=11 // pred_fallthru
        _
      // Predicated region
      $region45: #{lstm_model_forward.1} parent=11 // pred_check
        %p405 = pneg %p275
      $region46: #{lstm_model_forward.1} parent=11 // pred_check_branch
        %407 = sbr.rel (%p405) target = $region48
      $region47: #{lstm_model_forward.1} parent=11 // pred_region
        _
      $region48: #{lstm_model_forward.1} parent=11 // pred_fallthru
        _
      // Predicated region
      $region49: #{lstm_model_forward.1} parent=11 // pred_check
        %p408 = pneg %p296
      $region50: #{lstm_model_forward.1} parent=11 // pred_check_branch
        %410 = sbr.rel (%p408) target = $region52
      $region51: #{lstm_model_forward.1} parent=11 // pred_region
        _
      $region52: #{lstm_model_forward.1} parent=11 // pred_fallthru
        _
      // Predicated region
      $region53: #{lstm_model_forward.1} parent=11 // pred_check
        %p411 = pneg %p317
      $region54: #{lstm_model_forward.1} parent=11 // pred_check_branch
        %413 = sbr.rel (%p411) target = $region56
      $region55: #{lstm_model_forward.1} parent=11 // pred_region
        _
      $region56: #{lstm_model_forward.1} parent=11 // pred_fallthru
        _
      // Predicated region
      $region57: #{lstm_model_forward.1} parent=11 // pred_check
        %p414 = pneg %p338
      $region58: #{lstm_model_forward.1} parent=11 // pred_check_branch
        %416 = sbr.rel (%p414) target = $region60
      $region59: #{lstm_model_forward.1} parent=11 // pred_region
        _
      $region60: #{lstm_model_forward.1} parent=11 // pred_fallthru
        _
    $region12: #{lstm_model_forward.1} parent=5 // pred_fallthru
      _
    %p417 = scmp.lt.s32.totalorder %s20, 6
    // Predicated region
    $region61: #{lstm_model_forward.1} parent=5 // pred_check
      %p418 = pneg %p417
    $region62: #{lstm_model_forward.1} parent=5 // pred_check_branch
      %420 = sbr.rel (%p418) target = $region64
    $region63: #{lstm_model_forward.1} parent=5 // pred_region
      // Predicated region
      $region65: #{lstm_model_forward.1} parent=63 // pred_check
        %p421 = pneg %p52
      $region66: #{lstm_model_forward.1} parent=63 // pred_check_branch
        %423 = sbr.rel (%p421) target = $region68
      $region67: #{lstm_model_forward.1} parent=63 // pred_region
        %s424 = smul.u32 2, %s27
        %p425 = scmp.lt.s32.totalorder %s424, 3
        %s426 = scalar_select %p425, %s424, 3
        %s427 = smul.addr %s426, 2
        %s428 = scalar_lea.vmem %s0, %s427
        %s429 = smul.u32 2, %s27
      $region68: #{lstm_model_forward.1} parent=63 // pred_fallthru
        _
      // Predicated region
      $region69: #{lstm_model_forward.1} parent=63 // pred_check
        %p430 = pneg %p80
      $region70: #{lstm_model_forward.1} parent=63 // pred_check_branch
        %432 = sbr.rel (%p430) target = $region72
      $region71: #{lstm_model_forward.1} parent=63 // pred_region
        %s433 = smul.u32 2, %s27
        %p434 = scmp.lt.s32.totalorder %s28, 2
        %s435 = scalar_select %p434, %s28, 2
        %p436 = scmp.lt.s32.totalorder %s433, 3
        %s437 = scalar_select %p436, %s433, 3
        %s438 = smul.addr %s435, 4
        %s439 = sadd.s32 %s437, %s438
        %s440 = smul.addr %s439, 2
        %s441 = scalar_lea.vmem %s1, %s440
        %s442 = smul.u32 2, %s27
      $region72: #{lstm_model_forward.1} parent=63 // pred_fallthru
        _
    $region64: #{lstm_model_forward.1} parent=5 // pred_fallthru
      _
    %p443 = scmp.le.s32.totalorder 1, %s20
    %p444 = scmp.lt.s32.totalorder %s20, 7
    %p445 = pnand %p443, %p444
    %p446 = pneg %p445
    // Predicated region
    $region73: #{lstm_model_forward.1} parent=5 // pred_check
      _
    $region74: #{lstm_model_forward.1} parent=5 // pred_check_branch
      %448 = sbr.rel (%p445) target = $region76
    $region75: #{lstm_model_forward.1} parent=5 // pred_region
      %s449 = ssub.s32 %s20, 1
      %s450 = smul.u32 2, %s29
      %p451 = scmp.lt.s32.totalorder %s450, 3
      %s452 = scalar_select %p451, %s450, 3
      %s453 = smul.addr %s452, 2
      %s454 = scalar_lea.vmem %s0, %s453
      %p455 = pneg %p58
      %p456 = pneg %p55
      %s457 = smul.u32 2, %s29
      %p458 = scmp.lt.s32.totalorder %s30, 2
      %s459 = scalar_select %p458, %s30, 2
      %p460 = scmp.lt.s32.totalorder %s457, 3
      %s461 = scalar_select %p460, %s457, 3
      %s462 = smul.addr %s459, 4
      %s463 = sadd.s32 %s461, %s462
      %s464 = smul.addr %s463, 2
      %s465 = scalar_lea.vmem %s1, %s464
      %p466 = pneg %p86
      %p467 = pneg %p83
      %p468 = pneg %p107
      %p469 = pneg %p104
      %p470 = pneg %p128
      %p471 = pneg %p125
      %p472 = pneg %p149
      %p473 = pneg %p146
      %p474 = pneg %p170
      %p475 = pneg %p167
      %p476 = pneg %p191
      %p477 = pneg %p188
      %p478 = pneg %p212
      %p479 = pneg %p209
      %p480 = pneg %p233
      %p481 = pneg %p230
      %p482 = pneg %p254
      %p483 = pneg %p251
      %p484 = pneg %p275
      %p485 = pneg %p272
      %p486 = pneg %p296
      %p487 = pneg %p293
      %p488 = pneg %p317
      %p489 = pneg %p314
      %p490 = pneg %p338
      %p491 = pneg %p335
      %p492 = pneg %p366
      %p493 = pneg %p363
      %s494 = smul.u32 2, %s29
      %p495 = scmp.lt.s32.totalorder %s30, 2
      %s496 = scalar_select %p495, %s30, 2
      %p497 = scmp.lt.s32.totalorder %s494, 3
      %s498 = scalar_select %p497, %s494, 3
      %s499 = smul.addr %s496, 4
      %s500 = sadd.s32 %s498, %s499
      %s501 = scalar_lea.vmem %s14, %s500
      %s502 = smul.u32 2, %s29
      %p503 = scmp.lt.s32.totalorder %s502, 3
      %s504 = scalar_select %p503, %s502, 3
      %s505 = smul.addr %s504, 2
      %s506 = scalar_lea.vmem %s0, %s505
      %s507 = smul.u32 2, %s29
      %s508 = smul.u32 2, %s29
      %p509 = scmp.lt.s32.totalorder %s30, 2
      %s510 = scalar_select %p509, %s30, 2
      %p511 = scmp.lt.s32.totalorder %s508, 3
      %s512 = scalar_select %p511, %s508, 3
      %s513 = smul.addr %s510, 4
      %s514 = sadd.s32 %s512, %s513
      %s515 = smul.addr %s514, 2
      %s516 = scalar_lea.vmem %s1, %s515
      %s517 = smul.u32 2, %s29
      %s518 = smul.u32 2, %s29
      %p519 = scmp.lt.s32.totalorder %s30, 2
      %s520 = scalar_select %p519, %s30, 2
      %p521 = scmp.lt.s32.totalorder %s518, 3
      %s522 = scalar_select %p521, %s518, 3
      %s523 = smul.addr %s520, 4
      %s524 = sadd.s32 %s522, %s523
      %s525 = scalar_lea.vmem %s14, %s524
      %s526 = smul.u32 2, %s29
      %p528 = scmp.eq.s32.totalorder %s30, 0
      // Predicated region
      $region77: #{lstm_model_forward.1} parent=75 // pred_check
        %p529 = pneg %p528
      $region78: #{lstm_model_forward.1} parent=75 // pred_check_branch
        %531 = sbr.rel (%p529) target = $region80
      $region79: #{lstm_model_forward.1} parent=75 // pred_region
        %v532 = vld [vmem:[%s2] sm:$0xf]
        %v533 = vld [vmem:[%s2 + $0x4] sm:$0xf]
        %v534 = vld [vmem:[%s2 + $0x8] sm:$0xf]
        %v535 = vld [vmem:[%s2 + $0xc] sm:$0xf]
        %v536 = vld [vmem:[%s2 + $0x10] sm:$0xf]
        %v537 = vld [vmem:[%s2 + $0x14] sm:$0xf]
        %v538 = vld [vmem:[%s2 + $0x18] sm:$0xf]
        %v539 = vld [vmem:[%s2 + $0x1c] sm:$0xf]
        %v540 = vld [vmem:[%s506] sm:$0xf]
        %v541 = vld [vmem:[%s3] sm:$0xff]
        %v542 = vld [vmem:[%s3 + $0x8] sm:$0xff]
        %v543 = vld [vmem:[%s3 + $0x10] sm:$0xff]
        %v544 = vld [vmem:[%s3 + $0x18] sm:$0xff]
        %v545 = vld [vmem:[%s3 + $0x20] sm:$0xff]
        %v546 = vld [vmem:[%s3 + $0x28] sm:$0xff]
        %v547 = vld [vmem:[%s3 + $0x30] sm:$0xff]
        %v548 = vld [vmem:[%s3 + $0x38] sm:$0xff]
        %550 = vset.pattern.permute.xlu0 0
        %551 = vperm.xlu0 %550, %v541
        %v552 = vpop.permute.xlu0 %551
        %555 = vset.pattern.permute.xlu0 0
        %556 = vperm.xlu0 %555, %v542
        %v557 = vpop.permute.xlu0 %556
        %560 = vset.pattern.permute.xlu0 0
        %561 = vperm.xlu0 %560, %v543
        %v562 = vpop.permute.xlu0 %561
        %565 = vset.pattern.permute.xlu0 0
        %566 = vperm.xlu0 %565, %v544
        %v567 = vpop.permute.xlu0 %566
        %570 = vset.pattern.permute.xlu0 0
        %571 = vperm.xlu0 %570, %v545
        %v572 = vpop.permute.xlu0 %571
        %575 = vset.pattern.permute.xlu0 0
        %576 = vperm.xlu0 %575, %v546
        %v577 = vpop.permute.xlu0 %576
        %580 = vset.pattern.permute.xlu0 0
        %581 = vperm.xlu0 %580, %v547
        %v582 = vpop.permute.xlu0 %581
        %585 = vset.pattern.permute.xlu0 0
        %586 = vperm.xlu0 %585, %v548
        %v587 = vpop.permute.xlu0 %586
        %v597 = vunpack.c.l.b16 %v532
        %v598 = vunpack.c.l.b16 %v533
        %v599 = vunpack.c.l.b16 %v534
        %v600 = vunpack.c.l.b16 %v535
        %v601 = vunpack.c.l.b16 %v536
        %v602 = vunpack.c.l.b16 %v537
        %v603 = vunpack.c.l.b16 %v538
        %v604 = vunpack.c.l.b16 %v539
        %v605 = vpack.c.b16 %v598, %v597
        %v606 = vpack.c.b16 %v600, %v599
        %v607 = vpack.c.b16 %v602, %v601
        %v608 = vpack.c.b16 %v604, %v603
        %v611 = vunpack.c.l.s4 1983009808
        %v612 = vunpack.c.0.s8 %v611
        %v613 = vlaneseq
        %v614 = vshrl.u32 %v613, 7
        %v615 = vsub.s32 %v612, %v614
        %v616 = vrot.slane %v540, %v615
        %v617 = vcombine.high %v616, %v616
        %vm618 = vcmask 31744
        %v620 = vsel %vm618, %v605, 0
        %v623 = vsel %vm618, %v606, 0
        %v626 = vsel %vm618, %v607, 0
        %v629 = vsel %vm618, %v608, 0
        %vm631 = vcmask 1041408
        %v633 = vsel %vm631, %v616, 0
        %v636 = vsel %vm631, %v617, 0
        %638 = vmatprep.subr.bf16.mxu0 0
        %639 = vmatpush1.bf16.msra.mxu0 0
        %640 = vmatprep.subr.bf16.mxu0 0
        %641 = vmatpush1.bf16.msra.mxu0 0
        %642 = vmatprep.subr.bf16.mxu0 0
        %643 = vmatpush1.bf16.msra.mxu0 0
        %644 = vmatprep.subr.bf16.mxu0 0
        %645 = vmatpush1.bf16.msra.mxu0 0
        %646 = vmatprep.subr.bf16.mxu0 0
        %647 = vmatpush1.bf16.msra.mxu0 0
        %648 = vmatprep.subr.bf16.mxu0 0
        %649 = vmatpush1.bf16.msra.mxu0 0
        %650 = vmatprep.subr.bf16.mxu0 0
        %651 = vmatpush1.bf16.msra.mxu0 0
        %652 = vmatprep.subr.bf16.mxu0 %v636
        %653 = vmatpush1.bf16.msra.mxu0 %v633
        %654 = vmatprep.subr.bf16.mxu0 0
        %655 = vmatpush2.bf16.msra.mxu0 0
        %656 = vmatprep.subr.bf16.mxu0 0
        %657 = vmatpush2.bf16.msra.mxu0 0
        %658 = vmatprep.subr.bf16.mxu0 0
        %659 = vmatpush2.bf16.msra.mxu0 0
        %660 = vmatprep.subr.bf16.mxu0 0
        %661 = vmatpush2.bf16.msra.mxu0 0
        %662 = vmatprep.subr.bf16.mxu0 0
        %663 = vmatpush2.bf16.msra.mxu0 0
        %664 = vmatprep.subr.bf16.mxu0 0
        %665 = vmatpush2.bf16.msra.mxu0 0
        %666 = vmatprep.subr.bf16.mxu0 0
        %667 = vmatpush2.bf16.msra.mxu0 0
        %668 = vmatprep.subr.bf16.mxu0 0
        %669 = vmatpush2.bf16.msra.mxu0 0
        %670 = vmatprep.mubr.bf16.mxu0 0
        %671 = vmatmul.mubr.bf16.gmra.mxu0 %v620
        %v672 = vpop.f32.mrf.mxu0
        %v673 = vadd.f32 %v552, %v672
        %v674 = vpop.f32.mrf.mxu0
        %v675 = vadd.f32 %v552, %v674
        %v676 = vpop.f32.mrf.mxu0
        %v677 = vadd.f32 %v557, %v676
        %v678 = vpop.f32.mrf.mxu0
        %v679 = vadd.f32 %v557, %v678
        %680 = vmatprep.mubr.bf16.mxu0 0
        %681 = vmatmul.mubr.bf16.gmra.mxu0 %v623
        %v682 = vpop.f32.mrf.mxu0
        %v683 = vadd.f32 %v562, %v682
        %v684 = vpop.f32.mrf.mxu0
        %v685 = vadd.f32 %v562, %v684
        %v686 = vpop.f32.mrf.mxu0
        %v687 = vadd.f32 %v567, %v686
        %v688 = vpop.f32.mrf.mxu0
        %v689 = vadd.f32 %v567, %v688
        %690 = vmatprep.mubr.bf16.mxu0 0
        %691 = vmatmul.mubr.bf16.gmra.mxu0 %v626
        %v692 = vpop.f32.mrf.mxu0
        %v693 = vadd.f32 %v572, %v692
        %v694 = vpop.f32.mrf.mxu0
        %v695 = vadd.f32 %v572, %v694
        %v696 = vpop.f32.mrf.mxu0
        %v697 = vadd.f32 %v577, %v696
        %v698 = vpop.f32.mrf.mxu0
        %v699 = vadd.f32 %v577, %v698
        %700 = vmatprep.mubr.bf16.mxu0 0
        %701 = vmatmul.mubr.bf16.gmra.mxu0 %v629
        %v702 = vpop.f32.mrf.mxu0
        %v703 = vadd.f32 %v582, %v702
        %v704 = vpop.f32.mrf.mxu0
        %v705 = vadd.f32 %v582, %v704
        %v706 = vpop.f32.mrf.mxu0
        %v707 = vadd.f32 %v587, %v706
        %v708 = vpop.f32.mrf.mxu0
        %v709 = vadd.f32 %v587, %v708
        %710 = vdwg.mxu0
        %v711 = vtanh.pop %v673
        %v712 = vtanh.pop %v675
        %v713 = vtanh.pop %v677
        %v714 = vtanh.pop %v679
        %v715 = vtanh.pop %v683
        %v716 = vtanh.pop %v685
        %v717 = vtanh.pop %v687
        %v718 = vtanh.pop %v689
        %v719 = vtanh.pop %v693
        %v720 = vtanh.pop %v695
        %v721 = vtanh.pop %v697
        %v722 = vtanh.pop %v699
        %v723 = vtanh.pop %v703
        %v724 = vtanh.pop %v705
        %v725 = vtanh.pop %v707
        %v726 = vtanh.pop %v709
        %727 = vst [vmem:[#allocation3] sm:$0xff] %v711
        %728 = vst [vmem:[#allocation3 + $0x8] sm:$0xff] %v712
        %729 = vst [vmem:[#allocation3 + $0x10] sm:$0xff] %v713
        %730 = vst [vmem:[#allocation3 + $0x18] sm:$0xff] %v714
        %731 = vst [vmem:[#allocation3 + $0x20] sm:$0xff] %v715
        %732 = vst [vmem:[#allocation3 + $0x28] sm:$0xff] %v716
        %733 = vst [vmem:[#allocation3 + $0x30] sm:$0xff] %v717
        %734 = vst [vmem:[#allocation3 + $0x38] sm:$0xff] %v718
        %v735 = vpack.c.bf16 %v721, %v719
        %v736 = vpack.c.bf16 %v722, %v720
        %v737 = vpack.c.bf16 %v725, %v723
        %v738 = vpack.c.bf16 %v726, %v724
        %v743 = vunpack.c.l.b16 %v735
        %v744 = vunpack.c.l.b16 %v736
        %v745 = vunpack.c.h.b16 %v735
        %v746 = vunpack.c.h.b16 %v736
        %v747 = vunpack.c.l.b16 %v737
        %v748 = vunpack.c.l.b16 %v738
        %v749 = vunpack.c.h.b16 %v737
        %v750 = vunpack.c.h.b16 %v738
        %v751 = vpack.c.b16 %v744, %v743
        %v752 = vpack.c.b16 %v746, %v745
        %v753 = vpack.c.b16 %v748, %v747
        %v754 = vpack.c.b16 %v750, %v749
        %759 = vst [vmem:[#allocation2] sm:$0xff] %v751
        %760 = vst [vmem:[#allocation2 + $0x8] sm:$0xff] %v752
        %761 = vst [vmem:[#allocation2 + $0x10] sm:$0xff] %v753
        %762 = vst [vmem:[#allocation2 + $0x18] sm:$0xff] %v754
      $region80: #{lstm_model_forward.1} parent=75 // pred_fallthru
        _
      %v763 = vld [vmem:[%s516] sm:$0xf]
      %v764 = vld [vmem:[%s4] sm:$0xf]
      %v765 = vld [vmem:[%s4 + $0x4] sm:$0xf]
      %v766 = vld [vmem:[%s4 + $0x8] sm:$0xf]
      %v767 = vld [vmem:[%s4 + $0xc] sm:$0xf]
      %v768 = vld [vmem:[%s4 + $0x10] sm:$0xf]
      %v769 = vld [vmem:[%s4 + $0x14] sm:$0xf]
      %v770 = vld [vmem:[%s4 + $0x18] sm:$0xf]
      %v771 = vld [vmem:[%s4 + $0x1c] sm:$0xf]
      %v772 = vld [vmem:[%s4 + $0x20] sm:$0xf]
      %v773 = vld [vmem:[%s4 + $0x24] sm:$0xf]
      %v774 = vld [vmem:[%s4 + $0x28] sm:$0xf]
      %v775 = vld [vmem:[%s4 + $0x2c] sm:$0xf]
      %v776 = vld [vmem:[%s4 + $0x30] sm:$0xf]
      %v777 = vld [vmem:[%s4 + $0x34] sm:$0xf]
      %v778 = vld [vmem:[%s4 + $0x38] sm:$0xf]
      %v779 = vld [vmem:[%s5] sm:$0xff]
      %v780 = vld [vmem:[%s5 + $0x8] sm:$0xff]
      %v781 = vld [vmem:[%s5 + $0x10] sm:$0xff]
      %v782 = vld [vmem:[%s5 + $0x18] sm:$0xff]
      %v783 = vld [vmem:[%s5 + $0x20] sm:$0xff]
      %v784 = vld [vmem:[%s5 + $0x28] sm:$0xff]
      %v785 = vld [vmem:[%s5 + $0x30] sm:$0xff]
      %v786 = vld [vmem:[%s5 + $0x38] sm:$0xff]
      %v787 = vld [vmem:[%s5 + $0x40] sm:$0xff]
      %v788 = vld [vmem:[%s5 + $0x48] sm:$0xff]
      %v789 = vld [vmem:[%s5 + $0x50] sm:$0xff]
      %v790 = vld [vmem:[%s5 + $0x58] sm:$0xff]
      %v791 = vld [vmem:[%s5 + $0x60] sm:$0xff]
      %v792 = vld [vmem:[%s5 + $0x68] sm:$0xff]
      %v793 = vld [vmem:[%s5 + $0x70] sm:$0xff]
      %795 = vset.pattern.permute.xlu0 0
      %796 = vperm.xlu0 %795, %v779
      %v797 = vpop.permute.xlu0 %796
      %800 = vset.pattern.permute.xlu0 0
      %801 = vperm.xlu0 %800, %v780
      %v802 = vpop.permute.xlu0 %801
      %805 = vset.pattern.permute.xlu0 0
      %806 = vperm.xlu0 %805, %v781
      %v807 = vpop.permute.xlu0 %806
      %810 = vset.pattern.permute.xlu0 0
      %811 = vperm.xlu0 %810, %v782
      %v812 = vpop.permute.xlu0 %811
      %815 = vset.pattern.permute.xlu0 0
      %816 = vperm.xlu0 %815, %v783
      %v817 = vpop.permute.xlu0 %816
      %820 = vset.pattern.permute.xlu0 0
      %821 = vperm.xlu0 %820, %v784
      %v822 = vpop.permute.xlu0 %821
      %825 = vset.pattern.permute.xlu0 0
      %826 = vperm.xlu0 %825, %v785
      %v827 = vpop.permute.xlu0 %826
      %830 = vset.pattern.permute.xlu0 0
      %831 = vperm.xlu0 %830, %v786
      %v832 = vpop.permute.xlu0 %831
      %835 = vset.pattern.permute.xlu0 0
      %836 = vperm.xlu0 %835, %v787
      %v837 = vpop.permute.xlu0 %836
      %840 = vset.pattern.permute.xlu0 0
      %841 = vperm.xlu0 %840, %v788
      %v842 = vpop.permute.xlu0 %841
      %845 = vset.pattern.permute.xlu0 0
      %846 = vperm.xlu0 %845, %v789
      %v847 = vpop.permute.xlu0 %846
      %850 = vset.pattern.permute.xlu0 0
      %851 = vperm.xlu0 %850, %v790
      %v852 = vpop.permute.xlu0 %851
      %855 = vset.pattern.permute.xlu0 0
      %856 = vperm.xlu0 %855, %v791
      %v857 = vpop.permute.xlu0 %856
      %860 = vset.pattern.permute.xlu0 0
      %861 = vperm.xlu0 %860, %v792
      %v862 = vpop.permute.xlu0 %861
      %865 = vset.pattern.permute.xlu0 0
      %866 = vperm.xlu0 %865, %v793
      %v867 = vpop.permute.xlu0 %866
      %v884 = vunpack.c.l.b16 %v764
      %v885 = vunpack.c.l.b16 %v765
      %v886 = vunpack.c.l.b16 %v766
      %v887 = vunpack.c.l.b16 %v767
      %v888 = vunpack.c.l.b16 %v768
      %v889 = vunpack.c.l.b16 %v769
      %v890 = vunpack.c.l.b16 %v770
      %v891 = vunpack.c.l.b16 %v771
      %v892 = vunpack.c.l.b16 %v772
      %v893 = vunpack.c.l.b16 %v773
      %v894 = vunpack.c.l.b16 %v774
      %v895 = vunpack.c.l.b16 %v775
      %v896 = vunpack.c.l.b16 %v776
      %v897 = vunpack.c.l.b16 %v777
      %v898 = vunpack.c.l.b16 %v778
      %v899 = vpack.c.b16 %v885, %v884
      %v900 = vpack.c.b16 %v887, %v886
      %v901 = vpack.c.b16 %v889, %v888
      %v902 = vpack.c.b16 %v891, %v890
      %v903 = vpack.c.b16 %v893, %v892
      %v904 = vpack.c.b16 %v895, %v894
      %v905 = vpack.c.b16 %v897, %v896
      %v906 = vpack.c.b16 %v898, %v898
      %v909 = vunpack.c.l.s4 1983009808
      %v910 = vunpack.c.0.s8 %v909
      %v911 = vlaneseq
      %v912 = vshrl.u32 %v911, 7
      %v913 = vsub.s32 %v910, %v912
      %v914 = vrot.slane %v763, %v913
      %v915 = vcombine.high %v914, %v914
      %vm916 = vcmask 23552
      %v918 = vsel %vm916, %v899, 0
      %v921 = vsel %vm916, %v900, 0
      %v924 = vsel %vm916, %v901, 0
      %v927 = vsel %vm916, %v902, 0
      %v930 = vsel %vm916, %v903, 0
      %v933 = vsel %vm916, %v904, 0
      %v936 = vsel %vm916, %v905, 0
      %v939 = vsel %vm916, %v906, 0
      %vm941 = vcmask 1040384
      %vm942 = vcmask 1041408
      %v943 = vsel %vm941, 4294967295, 65535
      %v944 = vsel %vm942, %v943, 0
      %v946 = vand.u32 %v914, %v944
      %v949 = vand.u32 %v915, %v944
      %951 = vmatprep.subr.bf16.mxu0 0
      %952 = vmatpush1.bf16.msra.mxu0 0
      %953 = vmatprep.subr.bf16.mxu0 0
      %954 = vmatpush1.bf16.msra.mxu0 0
      %955 = vmatprep.subr.bf16.mxu0 0
      %956 = vmatpush1.bf16.msra.mxu0 0
      %957 = vmatprep.subr.bf16.mxu0 0
      %958 = vmatpush1.bf16.msra.mxu0 0
      %959 = vmatprep.subr.bf16.mxu0 0
      %960 = vmatpush1.bf16.msra.mxu0 0
      %961 = vmatprep.subr.bf16.mxu0 0
      %962 = vmatpush1.bf16.msra.mxu0 0
      %963 = vmatprep.subr.bf16.mxu0 0
      %964 = vmatpush1.bf16.msra.mxu0 0
      %965 = vmatprep.subr.bf16.mxu0 %v949
      %966 = vmatpush1.bf16.msra.mxu0 %v946
      %967 = vmatprep.subr.bf16.mxu0 0
      %968 = vmatpush2.bf16.msra.mxu0 0
      %969 = vmatprep.subr.bf16.mxu0 0
      %970 = vmatpush2.bf16.msra.mxu0 0
      %971 = vmatprep.subr.bf16.mxu0 0
      %972 = vmatpush2.bf16.msra.mxu0 0
      %973 = vmatprep.subr.bf16.mxu0 0
      %974 = vmatpush2.bf16.msra.mxu0 0
      %975 = vmatprep.subr.bf16.mxu0 0
      %976 = vmatpush2.bf16.msra.mxu0 0
      %977 = vmatprep.subr.bf16.mxu0 0
      %978 = vmatpush2.bf16.msra.mxu0 0
      %979 = vmatprep.subr.bf16.mxu0 0
      %980 = vmatpush2.bf16.msra.mxu0 0
      %981 = vmatprep.subr.bf16.mxu0 0
      %982 = vmatpush2.bf16.msra.mxu0 0
      %983 = vmatprep.mubr.bf16.mxu0 0
      %984 = vmatmul.mubr.bf16.gmra.mxu0 %v918
      %v985 = vpop.f32.mrf.mxu0
      %v986 = vadd.f32 %v797, %v985
      %v987 = vpop.f32.mrf.mxu0
      %v988 = vadd.f32 %v797, %v987
      %v989 = vpop.f32.mrf.mxu0
      %v990 = vadd.f32 %v802, %v989
      %v991 = vpop.f32.mrf.mxu0
      %v992 = vadd.f32 %v802, %v991
      %993 = vmatprep.mubr.bf16.mxu0 0
      %994 = vmatmul.mubr.bf16.gmra.mxu0 %v921
      %v995 = vpop.f32.mrf.mxu0
      %v996 = vadd.f32 %v807, %v995
      %v997 = vpop.f32.mrf.mxu0
      %v998 = vadd.f32 %v807, %v997
      %v999 = vpop.f32.mrf.mxu0
      %v1000 = vadd.f32 %v812, %v999
      %v1001 = vpop.f32.mrf.mxu0
      %v1002 = vadd.f32 %v812, %v1001
      %1003 = vmatprep.mubr.bf16.mxu0 0
      %1004 = vmatmul.mubr.bf16.gmra.mxu0 %v924
      %v1005 = vpop.f32.mrf.mxu0
      %v1006 = vadd.f32 %v817, %v1005
      %v1007 = vpop.f32.mrf.mxu0
      %v1008 = vadd.f32 %v817, %v1007
      %v1009 = vpop.f32.mrf.mxu0
      %v1010 = vadd.f32 %v822, %v1009
      %v1011 = vpop.f32.mrf.mxu0
      %v1012 = vadd.f32 %v822, %v1011
      %1013 = vmatprep.mubr.bf16.mxu0 0
      %1014 = vmatmul.mubr.bf16.gmra.mxu0 %v927
      %v1015 = vpop.f32.mrf.mxu0
      %v1016 = vadd.f32 %v827, %v1015
      %v1017 = vpop.f32.mrf.mxu0
      %v1018 = vadd.f32 %v827, %v1017
      %v1019 = vpop.f32.mrf.mxu0
      %v1020 = vadd.f32 %v832, %v1019
      %v1021 = vpop.f32.mrf.mxu0
      %v1022 = vadd.f32 %v832, %v1021
      %1023 = vmatprep.mubr.bf16.mxu0 0
      %1024 = vmatmul.mubr.bf16.gmra.mxu0 %v930
      %v1025 = vpop.f32.mrf.mxu0
      %v1026 = vadd.f32 %v837, %v1025
      %v1027 = vpop.f32.mrf.mxu0
      %v1028 = vadd.f32 %v837, %v1027
      %v1029 = vpop.f32.mrf.mxu0
      %v1030 = vadd.f32 %v842, %v1029
      %v1031 = vpop.f32.mrf.mxu0
      %v1032 = vadd.f32 %v842, %v1031
      %1033 = vmatprep.mubr.bf16.mxu0 0
      %1034 = vmatmul.mubr.bf16.gmra.mxu0 %v933
      %v1035 = vpop.f32.mrf.mxu0
      %v1036 = vadd.f32 %v847, %v1035
      %v1037 = vpop.f32.mrf.mxu0
      %v1038 = vadd.f32 %v847, %v1037
      %v1039 = vpop.f32.mrf.mxu0
      %v1040 = vadd.f32 %v852, %v1039
      %v1041 = vpop.f32.mrf.mxu0
      %v1042 = vadd.f32 %v852, %v1041
      %1043 = vmatprep.mubr.bf16.mxu0 0
      %1044 = vmatmul.mubr.bf16.gmra.mxu0 %v936
      %v1045 = vpop.f32.mrf.mxu0
      %v1046 = vadd.f32 %v857, %v1045
      %v1047 = vpop.f32.mrf.mxu0
      %v1048 = vadd.f32 %v857, %v1047
      %v1049 = vpop.f32.mrf.mxu0
      %v1050 = vadd.f32 %v862, %v1049
      %v1051 = vpop.f32.mrf.mxu0
      %v1052 = vadd.f32 %v862, %v1051
      %1053 = vmatprep.mubr.bf16.mxu0 0
      %1054 = vmatmul.mubr.bf16.gmra.mxu0 %v939
      %v1055 = vpop.f32.mrf.mxu0
      %v1056 = vadd.f32 %v867, %v1055
      %v1057 = vpop.f32.mrf.mxu0
      %v1058 = vadd.f32 %v867, %v1057
      %v1059 = vpop.f32.mrf.mxu0
      %v1060 = vpop.f32.mrf.mxu0
      %1061 = vdwg.mxu0
      %v1062 = vmax.f32 %v986, 0.0
      %v1063 = vmax.f32 %v988, 0.0
      %v1064 = vmax.f32 %v990, 0.0
      %v1065 = vmax.f32 %v992, 0.0
      %v1066 = vmax.f32 %v996, 0.0
      %v1067 = vmax.f32 %v998, 0.0
      %v1068 = vmax.f32 %v1000, 0.0
      %v1069 = vmax.f32 %v1002, 0.0
      %v1070 = vmax.f32 %v1006, 0.0
      %v1071 = vmax.f32 %v1008, 0.0
      %v1072 = vmax.f32 %v1010, 0.0
      %v1073 = vmax.f32 %v1012, 0.0
      %v1074 = vmax.f32 %v1016, 0.0
      %v1075 = vmax.f32 %v1018, 0.0
      %v1076 = vmax.f32 %v1020, 0.0
      %v1077 = vmax.f32 %v1022, 0.0
      %v1078 = vmax.f32 %v1026, 0.0
      %v1079 = vmax.f32 %v1028, 0.0
      %v1080 = vmax.f32 %v1030, 0.0
      %v1081 = vmax.f32 %v1032, 0.0
      %v1082 = vmax.f32 %v1036, 0.0
      %v1083 = vmax.f32 %v1038, 0.0
      %v1084 = vmax.f32 %v1040, 0.0
      %v1085 = vmax.f32 %v1042, 0.0
      %v1086 = vmax.f32 %v1046, 0.0
      %v1087 = vmax.f32 %v1048, 0.0
      %v1088 = vmax.f32 %v1050, 0.0
      %v1089 = vmax.f32 %v1052, 0.0
      %v1090 = vmax.f32 %v1056, 0.0
      %v1091 = vmax.f32 %v1058, 0.0
      %v1092 = vpack.c.bf16 %v1064, %v1062
      %v1093 = vpack.c.bf16 %v1065, %v1063
      %v1094 = vpack.c.bf16 %v1068, %v1066
      %v1095 = vpack.c.bf16 %v1069, %v1067
      %v1096 = vpack.c.bf16 %v1072, %v1070
      %v1097 = vpack.c.bf16 %v1073, %v1071
      %v1098 = vpack.c.bf16 %v1076, %v1074
      %v1099 = vpack.c.bf16 %v1077, %v1075
      %v1100 = vpack.c.bf16 %v1080, %v1078
      %v1101 = vpack.c.bf16 %v1081, %v1079
      %v1102 = vpack.c.bf16 %v1084, %v1082
      %v1103 = vpack.c.bf16 %v1085, %v1083
      %v1104 = vpack.c.bf16 %v1088, %v1086
      %v1105 = vpack.c.bf16 %v1089, %v1087
      %v1106 = vpack.c.bf16 %v1090, %v1090
      %v1107 = vpack.c.bf16 %v1091, %v1091
      %v1108 = vld [vmem:[#allocation2] sm:$0xff]
      %v1109 = vld [vmem:[#allocation2 + $0x8] sm:$0xff]
      %v1110 = vld [vmem:[#allocation2 + $0x10] sm:$0xff]
      %v1111 = vld [vmem:[#allocation2 + $0x18] sm:$0xff]
      %v1112 = vld [vmem:[%s9] sm:$0xf]
      %v1113 = vld [vmem:[%s9 + $0x4] sm:$0xf]
      %v1114 = vld [vmem:[%s9 + $0x8] sm:$0xf]
      %v1115 = vld [vmem:[%s9 + $0xc] sm:$0xf]
      %v1116 = vld [vmem:[%s6] sm:$0xf]
      %v1117 = vld [vmem:[%s6 + $0x4] sm:$0xf]
      %v1118 = vld [vmem:[%s6 + $0x8] sm:$0xf]
      %v1119 = vld [vmem:[%s6 + $0xc] sm:$0xf]
      %v1120 = vld [vmem:[%s6 + $0x10] sm:$0xf]
      %v1121 = vld [vmem:[%s6 + $0x14] sm:$0xf]
      %v1122 = vld [vmem:[%s6 + $0x18] sm:$0xf]
      %v1123 = vld [vmem:[%s6 + $0x1c] sm:$0xf]
      %v1124 = vld [vmem:[%s6 + $0x20] sm:$0xf]
      %v1125 = vld [vmem:[%s6 + $0x24] sm:$0xf]
      %v1126 = vld [vmem:[%s6 + $0x28] sm:$0xf]
      %v1127 = vld [vmem:[%s6 + $0x2c] sm:$0xf]
      %v1128 = vld [vmem:[%s6 + $0x30] sm:$0xf]
      %v1129 = vld [vmem:[%s6 + $0x34] sm:$0xf]
      %v1130 = vld [vmem:[%s6 + $0x38] sm:$0xf]
      %v1131 = vld [vmem:[%s6 + $0x3c] sm:$0xf]
      %v1132 = vld [vmem:[%s7] sm:$0xf]
      %v1133 = vld [vmem:[%s7 + $0x4] sm:$0xf]
      %v1134 = vld [vmem:[%s7 + $0x8] sm:$0xf]
      %v1135 = vld [vmem:[%s7 + $0xc] sm:$0xf]
      %v1136 = vld [vmem:[%s7 + $0x10] sm:$0xf]
      %v1137 = vld [vmem:[%s7 + $0x14] sm:$0xf]
      %v1138 = vld [vmem:[%s7 + $0x18] sm:$0xf]
      %v1139 = vld [vmem:[%s7 + $0x1c] sm:$0xf]
      %v1140 = vld [vmem:[%s7 + $0x20] sm:$0xf]
      %v1141 = vld [vmem:[%s7 + $0x24] sm:$0xf]
      %v1142 = vld [vmem:[%s7 + $0x28] sm:$0xf]
      %v1143 = vld [vmem:[%s7 + $0x2c] sm:$0xf]
      %v1144 = vld [vmem:[%s7 + $0x30] sm:$0xf]
      %v1145 = vld [vmem:[%s7 + $0x34] sm:$0xf]
      %v1146 = vld [vmem:[%s7 + $0x38] sm:$0xf]
      %v1147 = vld [vmem:[%s7 + $0x3c] sm:$0xf]
      %v1164 = vunpack.c.l.b16 %v1132
      %v1165 = vunpack.c.l.b16 %v1133
      %v1166 = vunpack.c.l.b16 %v1134
      %v1167 = vunpack.c.l.b16 %v1135
      %v1168 = vunpack.c.l.b16 %v1136
      %v1169 = vunpack.c.l.b16 %v1137
      %v1170 = vunpack.c.l.b16 %v1138
      %v1171 = vunpack.c.l.b16 %v1139
      %v1172 = vunpack.c.l.b16 %v1140
      %v1173 = vunpack.c.l.b16 %v1141
      %v1174 = vunpack.c.l.b16 %v1142
      %v1175 = vunpack.c.l.b16 %v1143
      %v1176 = vunpack.c.l.b16 %v1144
      %v1177 = vunpack.c.l.b16 %v1145
      %v1178 = vunpack.c.l.b16 %v1146
      %v1179 = vunpack.c.l.b16 %v1147
      %v1180 = vpack.c.b16 %v1165, %v1164
      %v1181 = vpack.c.b16 %v1167, %v1166
      %v1182 = vpack.c.b16 %v1169, %v1168
      %v1183 = vpack.c.b16 %v1171, %v1170
      %v1184 = vpack.c.b16 %v1173, %v1172
      %v1185 = vpack.c.b16 %v1175, %v1174
      %v1186 = vpack.c.b16 %v1177, %v1176
      %v1187 = vpack.c.b16 %v1179, %v1178
      %v1192 = vunpack.c.l.b16 %v1108
      %v1193 = vunpack.c.h.b16 %v1108
      %v1194 = vunpack.c.l.b16 %v1109
      %v1195 = vunpack.c.h.b16 %v1109
      %v1196 = vunpack.c.l.b16 %v1110
      %v1197 = vunpack.c.h.b16 %v1110
      %v1198 = vunpack.c.l.b16 %v1111
      %v1199 = vunpack.c.h.b16 %v1111
      %v1200 = vpack.c.b16 %v1194, %v1192
      %v1201 = vpack.c.b16 %v1195, %v1193
      %v1202 = vpack.c.b16 %v1198, %v1196
      %v1203 = vpack.c.b16 %v1199, %v1197
      %vm1208 = vcmask 261120
      %v1210 = vsel %vm1208, %v1180, 0
      %v1213 = vsel %vm1208, %v1181, 0
      %v1216 = vsel %vm1208, %v1182, 0
      %v1219 = vsel %vm1208, %v1183, 0
      %v1222 = vsel %vm1208, %v1184, 0
      %v1225 = vsel %vm1208, %v1185, 0
      %v1228 = vsel %vm1208, %v1186, 0
      %v1231 = vsel %vm1208, %v1187, 0
      %1233 = vmatprep.subr.bf16.mxu0 0
      %1234 = vmatpush1.bf16.msra.mxu0 0
      %1235 = vmatprep.subr.bf16.mxu0 0
      %1236 = vmatpush1.bf16.msra.mxu0 0
      %1237 = vmatprep.subr.bf16.mxu0 0
      %1238 = vmatpush1.bf16.msra.mxu0 0
      %1239 = vmatprep.subr.bf16.mxu0 0
      %1240 = vmatpush1.bf16.msra.mxu0 0
      %1241 = vmatprep.subr.bf16.mxu0 0
      %1242 = vmatpush1.bf16.msra.mxu0 0
      %1243 = vmatprep.subr.bf16.mxu0 0
      %1244 = vmatpush1.bf16.msra.mxu0 0
      %1245 = vmatprep.subr.bf16.mxu0 %v1203
      %1246 = vmatpush1.bf16.msra.mxu0 %v1202
      %1247 = vmatprep.subr.bf16.mxu0 %v1201
      %1248 = vmatpush1.bf16.msra.mxu0 %v1200
      %1249 = vmatprep.subr.bf16.mxu0 0
      %1250 = vmatpush2.bf16.msra.mxu0 0
      %1251 = vmatprep.subr.bf16.mxu0 0
      %1252 = vmatpush2.bf16.msra.mxu0 0
      %1253 = vmatprep.subr.bf16.mxu0 0
      %1254 = vmatpush2.bf16.msra.mxu0 0
      %1255 = vmatprep.subr.bf16.mxu0 0
      %1256 = vmatpush2.bf16.msra.mxu0 0
      %1257 = vmatprep.subr.bf16.mxu0 0
      %1258 = vmatpush2.bf16.msra.mxu0 0
      %1259 = vmatprep.subr.bf16.mxu0 0
      %1260 = vmatpush2.bf16.msra.mxu0 0
      %1261 = vmatprep.subr.bf16.mxu0 0
      %1262 = vmatpush2.bf16.msra.mxu0 0
      %1263 = vmatprep.subr.bf16.mxu0 0
      %1264 = vmatpush2.bf16.msra.mxu0 0
      %1265 = vmatprep.mubr.bf16.mxu0 0
      %1266 = vmatmul.mubr.bf16.gmra.mxu0 %v1210
      %v1267 = vpop.f32.mrf.mxu0
      %v1268 = vadd.f32 0.0, %v1267
      %v1269 = vpop.f32.mrf.mxu0
      %v1270 = vadd.f32 0.0, %v1269
      %v1271 = vpop.f32.mrf.mxu0
      %v1272 = vadd.f32 0.0, %v1271
      %v1273 = vpop.f32.mrf.mxu0
      %v1274 = vadd.f32 0.0, %v1273
      %1275 = vmatprep.mubr.bf16.mxu0 0
      %1276 = vmatmul.mubr.bf16.gmra.mxu0 %v1213
      %v1277 = vpop.f32.mrf.mxu0
      %v1278 = vadd.f32 0.0, %v1277
      %v1279 = vpop.f32.mrf.mxu0
      %v1280 = vadd.f32 0.0, %v1279
      %v1281 = vpop.f32.mrf.mxu0
      %v1282 = vadd.f32 0.0, %v1281
      %v1283 = vpop.f32.mrf.mxu0
      %v1284 = vadd.f32 0.0, %v1283
      %1285 = vmatprep.mubr.bf16.mxu0 0
      %1286 = vmatmul.mubr.bf16.gmra.mxu0 %v1216
      %v1287 = vpop.f32.mrf.mxu0
      %v1288 = vadd.f32 0.0, %v1287
      %v1289 = vpop.f32.mrf.mxu0
      %v1290 = vadd.f32 0.0, %v1289
      %v1291 = vpop.f32.mrf.mxu0
      %v1292 = vadd.f32 0.0, %v1291
      %v1293 = vpop.f32.mrf.mxu0
      %v1294 = vadd.f32 0.0, %v1293
      %1295 = vmatprep.mubr.bf16.mxu0 0
      %1296 = vmatmul.mubr.bf16.gmra.mxu0 %v1219
      %v1297 = vpop.f32.mrf.mxu0
      %v1298 = vadd.f32 0.0, %v1297
      %v1299 = vpop.f32.mrf.mxu0
      %v1300 = vadd.f32 0.0, %v1299
      %v1301 = vpop.f32.mrf.mxu0
      %v1302 = vadd.f32 0.0, %v1301
      %v1303 = vpop.f32.mrf.mxu0
      %v1304 = vadd.f32 0.0, %v1303
      %1305 = vmatprep.mubr.bf16.mxu0 0
      %1306 = vmatmul.mubr.bf16.gmra.mxu0 %v1222
      %v1307 = vpop.f32.mrf.mxu0
      %v1308 = vadd.f32 0.0, %v1307
      %v1309 = vpop.f32.mrf.mxu0
      %v1310 = vadd.f32 0.0, %v1309
      %v1311 = vpop.f32.mrf.mxu0
      %v1312 = vadd.f32 0.0, %v1311
      %v1313 = vpop.f32.mrf.mxu0
      %v1314 = vadd.f32 0.0, %v1313
      %1315 = vmatprep.mubr.bf16.mxu0 0
      %1316 = vmatmul.mubr.bf16.gmra.mxu0 %v1225
      %v1317 = vpop.f32.mrf.mxu0
      %v1318 = vadd.f32 0.0, %v1317
      %v1319 = vpop.f32.mrf.mxu0
      %v1320 = vadd.f32 0.0, %v1319
      %v1321 = vpop.f32.mrf.mxu0
      %v1322 = vadd.f32 0.0, %v1321
      %v1323 = vpop.f32.mrf.mxu0
      %v1324 = vadd.f32 0.0, %v1323
      %1325 = vmatprep.mubr.bf16.mxu0 0
      %1326 = vmatmul.mubr.bf16.gmra.mxu0 %v1228
      %v1327 = vpop.f32.mrf.mxu0
      %v1328 = vadd.f32 0.0, %v1327
      %v1329 = vpop.f32.mrf.mxu0
      %v1330 = vadd.f32 0.0, %v1329
      %v1331 = vpop.f32.mrf.mxu0
      %v1332 = vadd.f32 0.0, %v1331
      %v1333 = vpop.f32.mrf.mxu0
      %v1334 = vadd.f32 0.0, %v1333
      %1335 = vmatprep.mubr.bf16.mxu0 0
      %1336 = vmatmul.mubr.bf16.gmra.mxu0 %v1231
      %v1337 = vpop.f32.mrf.mxu0
      %v1338 = vadd.f32 0.0, %v1337
      %v1339 = vpop.f32.mrf.mxu0
      %v1340 = vadd.f32 0.0, %v1339
      %v1341 = vpop.f32.mrf.mxu0
      %v1342 = vadd.f32 0.0, %v1341
      %v1343 = vpop.f32.mrf.mxu0
      %v1344 = vadd.f32 0.0, %v1343
      %1345 = vdwg.mxu0
      %v1362 = vunpack.c.l.b16 %v1116
      %v1363 = vunpack.c.l.b16 %v1117
      %v1364 = vunpack.c.l.b16 %v1118
      %v1365 = vunpack.c.l.b16 %v1119
      %v1366 = vunpack.c.l.b16 %v1120
      %v1367 = vunpack.c.l.b16 %v1121
      %v1368 = vunpack.c.l.b16 %v1122
      %v1369 = vunpack.c.l.b16 %v1123
      %v1370 = vunpack.c.l.b16 %v1124
      %v1371 = vunpack.c.l.b16 %v1125
      %v1372 = vunpack.c.l.b16 %v1126
      %v1373 = vunpack.c.l.b16 %v1127
      %v1374 = vunpack.c.l.b16 %v1128
      %v1375 = vunpack.c.l.b16 %v1129
      %v1376 = vunpack.c.l.b16 %v1130
      %v1377 = vunpack.c.l.b16 %v1131
      %v1378 = vpack.c.b16 %v1363, %v1362
      %v1379 = vpack.c.b16 %v1365, %v1364
      %v1380 = vpack.c.b16 %v1367, %v1366
      %v1381 = vpack.c.b16 %v1369, %v1368
      %v1382 = vpack.c.b16 %v1371, %v1370
      %v1383 = vpack.c.b16 %v1373, %v1372
      %v1384 = vpack.c.b16 %v1375, %v1374
      %v1385 = vpack.c.b16 %v1377, %v1376
      %v1387 = vsel %vm1208, %v1378, 0
      %v1390 = vsel %vm1208, %v1379, 0
      %v1393 = vsel %vm1208, %v1380, 0
      %v1396 = vsel %vm1208, %v1381, 0
      %v1399 = vsel %vm1208, %v1382, 0
      %v1402 = vsel %vm1208, %v1383, 0
      %v1405 = vsel %vm1208, %v1384, 0
      %v1408 = vsel %vm1208, %v1385, 0
      %1410 = vmatprep.subr.bf16.mxu0 0
      %1411 = vmatpush1.bf16.msra.mxu0 0
      %1412 = vmatprep.subr.bf16.mxu0 0
      %1413 = vmatpush1.bf16.msra.mxu0 0
      %1414 = vmatprep.subr.bf16.mxu0 0
      %1415 = vmatpush1.bf16.msra.mxu0 0
      %1416 = vmatprep.subr.bf16.mxu0 0
      %1417 = vmatpush1.bf16.msra.mxu0 0
      %1418 = vmatprep.subr.bf16.mxu0 0
      %1419 = vmatpush1.bf16.msra.mxu0 0
      %1420 = vmatprep.subr.bf16.mxu0 0
      %1421 = vmatpush1.bf16.msra.mxu0 0
      %1422 = vmatprep.subr.bf16.mxu0 %v1095
      %1423 = vmatpush1.bf16.msra.mxu0 %v1094
      %1424 = vmatprep.subr.bf16.mxu0 %v1093
      %1425 = vmatpush1.bf16.msra.mxu0 %v1092
      %1426 = vmatprep.subr.bf16.mxu0 0
      %1427 = vmatpush2.bf16.msra.mxu0 0
      %1428 = vmatprep.subr.bf16.mxu0 0
      %1429 = vmatpush2.bf16.msra.mxu0 0
      %1430 = vmatprep.subr.bf16.mxu0 0
      %1431 = vmatpush2.bf16.msra.mxu0 0
      %1432 = vmatprep.subr.bf16.mxu0 0
      %1433 = vmatpush2.bf16.msra.mxu0 0
      %1434 = vmatprep.subr.bf16.mxu0 0
      %1435 = vmatpush2.bf16.msra.mxu0 0
      %1436 = vmatprep.subr.bf16.mxu0 0
      %1437 = vmatpush2.bf16.msra.mxu0 0
      %1438 = vmatprep.subr.bf16.mxu0 0
      %1439 = vmatpush2.bf16.msra.mxu0 0
      %1440 = vmatprep.subr.bf16.mxu0 0
      %1441 = vmatpush2.bf16.msra.mxu0 0
      %1442 = vmatprep.mubr.bf16.mxu0 0
      %1443 = vmatmul.mubr.bf16.gmra.mxu0 %v1387
      %v1444 = vpop.f32.mrf.mxu0
      %v1445 = vadd.f32 %v1268, %v1444
      %v1446 = vpop.f32.mrf.mxu0
      %v1447 = vadd.f32 %v1270, %v1446
      %v1448 = vpop.f32.mrf.mxu0
      %v1449 = vadd.f32 %v1272, %v1448
      %v1450 = vpop.f32.mrf.mxu0
      %v1451 = vadd.f32 %v1274, %v1450
      %1452 = vmatprep.mubr.bf16.mxu0 0
      %1453 = vmatmul.mubr.bf16.gmra.mxu0 %v1390
      %v1454 = vpop.f32.mrf.mxu0
      %v1455 = vadd.f32 %v1278, %v1454
      %v1456 = vpop.f32.mrf.mxu0
      %v1457 = vadd.f32 %v1280, %v1456
      %v1458 = vpop.f32.mrf.mxu0
      %v1459 = vadd.f32 %v1282, %v1458
      %v1460 = vpop.f32.mrf.mxu0
      %v1461 = vadd.f32 %v1284, %v1460
      %1462 = vmatprep.mubr.bf16.mxu0 0
      %1463 = vmatmul.mubr.bf16.gmra.mxu0 %v1393
      %v1464 = vpop.f32.mrf.mxu0
      %v1465 = vadd.f32 %v1288, %v1464
      %v1466 = vpop.f32.mrf.mxu0
      %v1467 = vadd.f32 %v1290, %v1466
      %v1468 = vpop.f32.mrf.mxu0
      %v1469 = vadd.f32 %v1292, %v1468
      %v1470 = vpop.f32.mrf.mxu0
      %v1471 = vadd.f32 %v1294, %v1470
      %1472 = vmatprep.mubr.bf16.mxu0 0
      %1473 = vmatmul.mubr.bf16.gmra.mxu0 %v1396
      %v1474 = vpop.f32.mrf.mxu0
      %v1475 = vadd.f32 %v1298, %v1474
      %v1476 = vpop.f32.mrf.mxu0
      %v1477 = vadd.f32 %v1300, %v1476
      %v1478 = vpop.f32.mrf.mxu0
      %v1479 = vadd.f32 %v1302, %v1478
      %v1480 = vpop.f32.mrf.mxu0
      %v1481 = vadd.f32 %v1304, %v1480
      %1482 = vmatprep.mubr.bf16.mxu0 0
      %1483 = vmatmul.mubr.bf16.gmra.mxu0 %v1399
      %v1484 = vpop.f32.mrf.mxu0
      %v1485 = vadd.f32 %v1308, %v1484
      %v1486 = vpop.f32.mrf.mxu0
      %v1487 = vadd.f32 %v1310, %v1486
      %v1488 = vpop.f32.mrf.mxu0
      %v1489 = vadd.f32 %v1312, %v1488
      %v1490 = vpop.f32.mrf.mxu0
      %v1491 = vadd.f32 %v1314, %v1490
      %1492 = vmatprep.mubr.bf16.mxu0 0
      %1493 = vmatmul.mubr.bf16.gmra.mxu0 %v1402
      %v1494 = vpop.f32.mrf.mxu0
      %v1495 = vadd.f32 %v1318, %v1494
      %v1496 = vpop.f32.mrf.mxu0
      %v1497 = vadd.f32 %v1320, %v1496
      %v1498 = vpop.f32.mrf.mxu0
      %v1499 = vadd.f32 %v1322, %v1498
      %v1500 = vpop.f32.mrf.mxu0
      %v1501 = vadd.f32 %v1324, %v1500
      %1502 = vmatprep.mubr.bf16.mxu0 0
      %1503 = vmatmul.mubr.bf16.gmra.mxu0 %v1405
      %v1504 = vpop.f32.mrf.mxu0
      %v1505 = vadd.f32 %v1328, %v1504
      %v1506 = vpop.f32.mrf.mxu0
      %v1507 = vadd.f32 %v1330, %v1506
      %v1508 = vpop.f32.mrf.mxu0
      %v1509 = vadd.f32 %v1332, %v1508
      %v1510 = vpop.f32.mrf.mxu0
      %v1511 = vadd.f32 %v1334, %v1510
      %1512 = vmatprep.mubr.bf16.mxu0 0
      %1513 = vmatmul.mubr.bf16.gmra.mxu0 %v1408
      %v1514 = vpop.f32.mrf.mxu0
      %v1515 = vadd.f32 %v1338, %v1514
      %v1516 = vpop.f32.mrf.mxu0
      %v1517 = vadd.f32 %v1340, %v1516
      %v1518 = vpop.f32.mrf.mxu0
      %v1519 = vadd.f32 %v1342, %v1518
      %v1520 = vpop.f32.mrf.mxu0
      %v1521 = vadd.f32 %v1344, %v1520
      %1522 = vdwg.mxu0
      %v1523 = vld [vmem:[%s8] sm:$0xff]
      %v1524 = vld [vmem:[%s8 + $0x8] sm:$0xff]
      %v1525 = vld [vmem:[%s8 + $0x10] sm:$0xff]
      %v1526 = vld [vmem:[%s8 + $0x18] sm:$0xff]
      %v1527 = vld [vmem:[%s8 + $0x20] sm:$0xff]
      %v1528 = vld [vmem:[%s8 + $0x28] sm:$0xff]
      %v1529 = vld [vmem:[%s8 + $0x30] sm:$0xff]
      %v1530 = vld [vmem:[%s8 + $0x38] sm:$0xff]
      %v1531 = vld [vmem:[%s8 + $0x40] sm:$0xff]
      %v1532 = vld [vmem:[%s8 + $0x48] sm:$0xff]
      %v1533 = vld [vmem:[%s8 + $0x50] sm:$0xff]
      %v1534 = vld [vmem:[%s8 + $0x58] sm:$0xff]
      %v1535 = vld [vmem:[%s8 + $0x60] sm:$0xff]
      %v1536 = vld [vmem:[%s8 + $0x68] sm:$0xff]
      %v1537 = vld [vmem:[%s8 + $0x70] sm:$0xff]
      %v1538 = vld [vmem:[%s8 + $0x78] sm:$0xff]
      %1540 = vset.pattern.permute.xlu0 0
      %1541 = vperm.xlu0 %1540, %v1523
      %v1542 = vpop.permute.xlu0 %1541
      %1545 = vset.pattern.permute.xlu0 0
      %1546 = vperm.xlu0 %1545, %v1524
      %v1547 = vpop.permute.xlu0 %1546
      %1550 = vset.pattern.permute.xlu0 0
      %1551 = vperm.xlu0 %1550, %v1525
      %v1552 = vpop.permute.xlu0 %1551
      %1555 = vset.pattern.permute.xlu0 0
      %1556 = vperm.xlu0 %1555, %v1526
      %v1557 = vpop.permute.xlu0 %1556
      %1560 = vset.pattern.permute.xlu0 0
      %1561 = vperm.xlu0 %1560, %v1527
      %v1562 = vpop.permute.xlu0 %1561
      %1565 = vset.pattern.permute.xlu0 0
      %1566 = vperm.xlu0 %1565, %v1528
      %v1567 = vpop.permute.xlu0 %1566
      %1570 = vset.pattern.permute.xlu0 0
      %1571 = vperm.xlu0 %1570, %v1529
      %v1572 = vpop.permute.xlu0 %1571
      %1575 = vset.pattern.permute.xlu0 0
      %1576 = vperm.xlu0 %1575, %v1530
      %v1577 = vpop.permute.xlu0 %1576
      %1580 = vset.pattern.permute.xlu0 0
      %1581 = vperm.xlu0 %1580, %v1531
      %v1582 = vpop.permute.xlu0 %1581
      %1585 = vset.pattern.permute.xlu0 0
      %1586 = vperm.xlu0 %1585, %v1532
      %v1587 = vpop.permute.xlu0 %1586
      %1590 = vset.pattern.permute.xlu0 0
      %1591 = vperm.xlu0 %1590, %v1533
      %v1592 = vpop.permute.xlu0 %1591
      %1595 = vset.pattern.permute.xlu0 0
      %1596 = vperm.xlu0 %1595, %v1534
      %v1597 = vpop.permute.xlu0 %1596
      %1600 = vset.pattern.permute.xlu0 0
      %1601 = vperm.xlu0 %1600, %v1535
      %v1602 = vpop.permute.xlu0 %1601
      %1605 = vset.pattern.permute.xlu0 0
      %1606 = vperm.xlu0 %1605, %v1536
      %v1607 = vpop.permute.xlu0 %1606
      %1610 = vset.pattern.permute.xlu0 0
      %1611 = vperm.xlu0 %1610, %v1537
      %v1612 = vpop.permute.xlu0 %1611
      %1615 = vset.pattern.permute.xlu0 0
      %1616 = vperm.xlu0 %1615, %v1538
      %v1617 = vpop.permute.xlu0 %1616
      %v1619 = vadd.f32 %v1445, %v1542
      %v1620 = vadd.f32 %v1447, %v1542
      %v1621 = vadd.f32 %v1449, %v1547
      %v1622 = vadd.f32 %v1451, %v1547
      %v1623 = vadd.f32 %v1455, %v1552
      %v1624 = vadd.f32 %v1457, %v1552
      %v1625 = vadd.f32 %v1459, %v1557
      %v1626 = vadd.f32 %v1461, %v1557
      %v1627 = vadd.f32 %v1465, %v1562
      %v1628 = vadd.f32 %v1467, %v1562
      %v1629 = vadd.f32 %v1469, %v1567
      %v1630 = vadd.f32 %v1471, %v1567
      %v1631 = vadd.f32 %v1475, %v1572
      %v1632 = vadd.f32 %v1477, %v1572
      %v1633 = vadd.f32 %v1479, %v1577
      %v1634 = vadd.f32 %v1481, %v1577
      %v1635 = vadd.f32 %v1485, %v1582
      %v1636 = vadd.f32 %v1487, %v1582
      %v1637 = vadd.f32 %v1489, %v1587
      %v1638 = vadd.f32 %v1491, %v1587
      %v1639 = vadd.f32 %v1495, %v1592
      %v1640 = vadd.f32 %v1497, %v1592
      %v1641 = vadd.f32 %v1499, %v1597
      %v1642 = vadd.f32 %v1501, %v1597
      %v1643 = vadd.f32 %v1505, %v1602
      %v1644 = vadd.f32 %v1507, %v1602
      %v1645 = vadd.f32 %v1509, %v1607
      %v1646 = vadd.f32 %v1511, %v1607
      %v1647 = vadd.f32 %v1515, %v1612
      %v1648 = vadd.f32 %v1517, %v1612
      %v1649 = vadd.f32 %v1519, %v1617
      %v1650 = vadd.f32 %v1521, %v1617
      %v1651 = vmul.f32 %v1619, 0.5
      %v1652 = vmul.f32 %v1620, 0.5
      %v1653 = vmul.f32 %v1621, 0.5
      %v1654 = vmul.f32 %v1622, 0.5
      %v1655 = vmul.f32 %v1623, 0.5
      %v1656 = vmul.f32 %v1624, 0.5
      %v1657 = vmul.f32 %v1625, 0.5
      %v1658 = vmul.f32 %v1626, 0.5
      %v1659 = vtanh.pop %v1651
      %v1660 = vtanh.pop %v1652
      %v1661 = vtanh.pop %v1653
      %v1662 = vtanh.pop %v1654
      %v1663 = vtanh.pop %v1655
      %v1664 = vtanh.pop %v1656
      %v1665 = vtanh.pop %v1657
      %v1666 = vtanh.pop %v1658
      %v1667 = vadd.f32 %v1659, 1.0
      %v1668 = vadd.f32 %v1660, 1.0
      %v1669 = vadd.f32 %v1661, 1.0
      %v1670 = vadd.f32 %v1662, 1.0
      %v1671 = vadd.f32 %v1663, 1.0
      %v1672 = vadd.f32 %v1664, 1.0
      %v1673 = vadd.f32 %v1665, 1.0
      %v1674 = vadd.f32 %v1666, 1.0
      %v1675 = vmul.f32 %v1667, 0.5
      %v1676 = vmul.f32 %v1668, 0.5
      %v1677 = vmul.f32 %v1669, 0.5
      %v1678 = vmul.f32 %v1670, 0.5
      %v1679 = vmul.f32 %v1671, 0.5
      %v1680 = vmul.f32 %v1672, 0.5
      %v1681 = vmul.f32 %v1673, 0.5
      %v1682 = vmul.f32 %v1674, 0.5
      %v1683 = vmul.f32 %v1627, 0.5
      %v1684 = vmul.f32 %v1628, 0.5
      %v1685 = vmul.f32 %v1629, 0.5
      %v1686 = vmul.f32 %v1630, 0.5
      %v1687 = vmul.f32 %v1631, 0.5
      %v1688 = vmul.f32 %v1632, 0.5
      %v1689 = vmul.f32 %v1633, 0.5
      %v1690 = vmul.f32 %v1634, 0.5
      %v1691 = vtanh.pop %v1683
      %v1692 = vtanh.pop %v1684
      %v1693 = vtanh.pop %v1685
      %v1694 = vtanh.pop %v1686
      %v1695 = vtanh.pop %v1687
      %v1696 = vtanh.pop %v1688
      %v1697 = vtanh.pop %v1689
      %v1698 = vtanh.pop %v1690
      %v1699 = vadd.f32 %v1691, 1.0
      %v1700 = vadd.f32 %v1692, 1.0
      %v1701 = vadd.f32 %v1693, 1.0
      %v1702 = vadd.f32 %v1694, 1.0
      %v1703 = vadd.f32 %v1695, 1.0
      %v1704 = vadd.f32 %v1696, 1.0
      %v1705 = vadd.f32 %v1697, 1.0
      %v1706 = vadd.f32 %v1698, 1.0
      %v1707 = vmul.f32 %v1699, 0.5
      %v1708 = vmul.f32 %v1700, 0.5
      %v1709 = vmul.f32 %v1701, 0.5
      %v1710 = vmul.f32 %v1702, 0.5
      %v1711 = vmul.f32 %v1703, 0.5
      %v1712 = vmul.f32 %v1704, 0.5
      %v1713 = vmul.f32 %v1705, 0.5
      %v1714 = vmul.f32 %v1706, 0.5
      %v1715 = vtanh.pop %v1635
      %v1716 = vtanh.pop %v1636
      %v1717 = vtanh.pop %v1637
      %v1718 = vtanh.pop %v1638
      %v1719 = vtanh.pop %v1639
      %v1720 = vtanh.pop %v1640
      %v1721 = vtanh.pop %v1641
      %v1722 = vtanh.pop %v1642
      %v1723 = vmul.f32 %v1643, 0.5
      %v1724 = vmul.f32 %v1644, 0.5
      %v1725 = vmul.f32 %v1645, 0.5
      %v1726 = vmul.f32 %v1646, 0.5
      %v1727 = vmul.f32 %v1647, 0.5
      %v1728 = vmul.f32 %v1648, 0.5
      %v1729 = vmul.f32 %v1649, 0.5
      %v1730 = vmul.f32 %v1650, 0.5
      %v1731 = vtanh.pop %v1723
      %v1732 = vtanh.pop %v1724
      %v1733 = vtanh.pop %v1725
      %v1734 = vtanh.pop %v1726
      %v1735 = vtanh.pop %v1727
      %v1736 = vtanh.pop %v1728
      %v1737 = vtanh.pop %v1729
      %v1738 = vtanh.pop %v1730
      %v1739 = vadd.f32 %v1731, 1.0
      %v1740 = vadd.f32 %v1732, 1.0
      %v1741 = vadd.f32 %v1733, 1.0
      %v1742 = vadd.f32 %v1734, 1.0
      %v1743 = vadd.f32 %v1735, 1.0
      %v1744 = vadd.f32 %v1736, 1.0
      %v1745 = vadd.f32 %v1737, 1.0
      %v1746 = vadd.f32 %v1738, 1.0
      %v1747 = vmul.f32 %v1739, 0.5
      %v1748 = vmul.f32 %v1740, 0.5
      %v1749 = vmul.f32 %v1741, 0.5
      %v1750 = vmul.f32 %v1742, 0.5
      %v1751 = vmul.f32 %v1743, 0.5
      %v1752 = vmul.f32 %v1744, 0.5
      %v1753 = vmul.f32 %v1745, 0.5
      %v1754 = vmul.f32 %v1746, 0.5
      %v1755 = vld [vmem:[#allocation3] sm:$0xff]
      %v1756 = vld [vmem:[#allocation3 + $0x8] sm:$0xff]
      %v1757 = vld [vmem:[#allocation3 + $0x10] sm:$0xff]
      %v1758 = vld [vmem:[#allocation3 + $0x18] sm:$0xff]
      %v1759 = vld [vmem:[#allocation3 + $0x20] sm:$0xff]
      %v1760 = vld [vmem:[#allocation3 + $0x28] sm:$0xff]
      %v1761 = vld [vmem:[#allocation3 + $0x30] sm:$0xff]
      %v1762 = vld [vmem:[#allocation3 + $0x38] sm:$0xff]
      %v1763 = vmul.f32 %v1707, %v1755
      %v1764 = vmul.f32 %v1708, %v1756
      %v1765 = vmul.f32 %v1709, %v1757
      %v1766 = vmul.f32 %v1710, %v1758
      %v1767 = vmul.f32 %v1711, %v1759
      %v1768 = vmul.f32 %v1712, %v1760
      %v1769 = vmul.f32 %v1713, %v1761
      %v1770 = vmul.f32 %v1714, %v1762
      %v1771 = vmul.f32 %v1675, %v1715
      %v1772 = vmul.f32 %v1676, %v1716
      %v1773 = vmul.f32 %v1677, %v1717
      %v1774 = vmul.f32 %v1678, %v1718
      %v1775 = vmul.f32 %v1679, %v1719
      %v1776 = vmul.f32 %v1680, %v1720
      %v1777 = vmul.f32 %v1681, %v1721
      %v1778 = vmul.f32 %v1682, %v1722
      %v1779 = vadd.f32 %v1763, %v1771
      %v1780 = vadd.f32 %v1764, %v1772
      %v1781 = vadd.f32 %v1765, %v1773
      %v1782 = vadd.f32 %v1766, %v1774
      %v1783 = vadd.f32 %v1767, %v1775
      %v1784 = vadd.f32 %v1768, %v1776
      %v1785 = vadd.f32 %v1769, %v1777
      %v1786 = vadd.f32 %v1770, %v1778
      %v1787 = vtanh.pop %v1779
      %v1788 = vtanh.pop %v1780
      %v1789 = vtanh.pop %v1781
      %v1790 = vtanh.pop %v1782
      %v1791 = vtanh.pop %v1783
      %v1792 = vtanh.pop %v1784
      %v1793 = vtanh.pop %v1785
      %v1794 = vtanh.pop %v1786
      %v1795 = vmul.f32 %v1747, %v1787
      %v1796 = vmul.f32 %v1748, %v1788
      %v1797 = vmul.f32 %v1749, %v1789
      %v1798 = vmul.f32 %v1750, %v1790
      %v1799 = vmul.f32 %v1751, %v1791
      %v1800 = vmul.f32 %v1752, %v1792
      %v1801 = vmul.f32 %v1753, %v1793
      %v1802 = vmul.f32 %v1754, %v1794
      %1803 = vst [vmem:[#allocation3] sm:$0xff] %v1779
      %1804 = vst [vmem:[#allocation3 + $0x8] sm:$0xff] %v1780
      %1805 = vst [vmem:[#allocation3 + $0x10] sm:$0xff] %v1781
      %1806 = vst [vmem:[#allocation3 + $0x18] sm:$0xff] %v1782
      %1807 = vst [vmem:[#allocation3 + $0x20] sm:$0xff] %v1783
      %1808 = vst [vmem:[#allocation3 + $0x28] sm:$0xff] %v1784
      %1809 = vst [vmem:[#allocation3 + $0x30] sm:$0xff] %v1785
      %1810 = vst [vmem:[#allocation3 + $0x38] sm:$0xff] %v1786
      %v1811 = vpack.c.bf16 %v1797, %v1795
      %v1812 = vpack.c.bf16 %v1798, %v1796
      %v1813 = vpack.c.bf16 %v1801, %v1799
      %v1814 = vpack.c.bf16 %v1802, %v1800
      %v1819 = vunpack.c.l.b16 %v1811
      %v1820 = vunpack.c.l.b16 %v1812
      %v1821 = vunpack.c.h.b16 %v1811
      %v1822 = vunpack.c.h.b16 %v1812
      %v1823 = vunpack.c.l.b16 %v1813
      %v1824 = vunpack.c.l.b16 %v1814
      %v1825 = vunpack.c.h.b16 %v1813
      %v1826 = vunpack.c.h.b16 %v1814
      %v1827 = vpack.c.b16 %v1820, %v1819
      %v1828 = vpack.c.b16 %v1822, %v1821
      %v1829 = vpack.c.b16 %v1824, %v1823
      %v1830 = vpack.c.b16 %v1826, %v1825
      %1835 = vst [vmem:[#allocation2] sm:$0xff] %v1827
      %1836 = vst [vmem:[#allocation2 + $0x8] sm:$0xff] %v1828
      %1837 = vst [vmem:[#allocation2 + $0x10] sm:$0xff] %v1829
      %1838 = vst [vmem:[#allocation2 + $0x18] sm:$0xff] %v1830
      %v1839 = vld [vmem:[%s10] sm:$0xf]
      %v1840 = vld [vmem:[%s10 + $0x4] sm:$0xf]
      %v1841 = vld [vmem:[%s10 + $0x8] sm:$0xf]
      %v1842 = vld [vmem:[%s10 + $0xc] sm:$0xf]
      %v1847 = vunpack.c.l.b16 %v1839
      %v1848 = vunpack.c.l.b16 %v1840
      %v1849 = vunpack.c.l.b16 %v1841
      %v1850 = vunpack.c.l.b16 %v1842
      %v1851 = vpack.c.b16 %v1848, %v1847
      %v1852 = vpack.c.b16 %v1850, %v1849
      %v1854 = vsel %vm1208, %v1851, 0
      %v1857 = vsel %vm1208, %v1852, 0
      %1859 = vmatprep.subr.bf16.mxu0 0
      %1860 = vmatpush1.bf16.msra.mxu0 0
      %1861 = vmatprep.subr.bf16.mxu0 0
      %1862 = vmatpush1.bf16.msra.mxu0 0
      %1863 = vmatprep.subr.bf16.mxu0 0
      %1864 = vmatpush1.bf16.msra.mxu0 0
      %1865 = vmatprep.subr.bf16.mxu0 0
      %1866 = vmatpush1.bf16.msra.mxu0 0
      %1867 = vmatprep.subr.bf16.mxu0 0
      %1868 = vmatpush1.bf16.msra.mxu0 0
      %1869 = vmatprep.subr.bf16.mxu0 0
      %1870 = vmatpush1.bf16.msra.mxu0 0
      %1871 = vmatprep.subr.bf16.mxu0 %v1814
      %1872 = vmatpush1.bf16.msra.mxu0 %v1813
      %1873 = vmatprep.subr.bf16.mxu0 %v1812
      %1874 = vmatpush1.bf16.msra.mxu0 %v1811
      %1875 = vmatprep.subr.bf16.mxu0 0
      %1876 = vmatpush2.bf16.msra.mxu0 0
      %1877 = vmatprep.subr.bf16.mxu0 0
      %1878 = vmatpush2.bf16.msra.mxu0 0
      %1879 = vmatprep.subr.bf16.mxu0 0
      %1880 = vmatpush2.bf16.msra.mxu0 0
      %1881 = vmatprep.subr.bf16.mxu0 0
      %1882 = vmatpush2.bf16.msra.mxu0 0
      %1883 = vmatprep.subr.bf16.mxu0 0
      %1884 = vmatpush2.bf16.msra.mxu0 0
      %1885 = vmatprep.subr.bf16.mxu0 0
      %1886 = vmatpush2.bf16.msra.mxu0 0
      %1887 = vmatprep.subr.bf16.mxu0 0
      %1888 = vmatpush2.bf16.msra.mxu0 0
      %1889 = vmatprep.subr.bf16.mxu0 0
      %1890 = vmatpush2.bf16.msra.mxu0 0
      %1891 = vmatprep.mubr.bf16.mxu0 0
      %1892 = vmatmul.mubr.bf16.gmra.mxu0 %v1854
      %v1893 = vpop.f32.mrf.mxu0
      %v1894 = vadd.f32 0.0, %v1893
      %v1895 = vpop.f32.mrf.mxu0
      %v1896 = vadd.f32 0.0, %v1895
      %v1897 = vpop.f32.mrf.mxu0
      %v1898 = vadd.f32 0.0, %v1897
      %v1899 = vpop.f32.mrf.mxu0
      %v1900 = vadd.f32 0.0, %v1899
      %1901 = vmatprep.mubr.bf16.mxu0 0
      %1902 = vmatmul.mubr.bf16.gmra.mxu0 %v1857
      %v1903 = vpop.f32.mrf.mxu0
      %v1904 = vadd.f32 0.0, %v1903
      %v1905 = vpop.f32.mrf.mxu0
      %v1906 = vadd.f32 0.0, %v1905
      %v1907 = vpop.f32.mrf.mxu0
      %v1908 = vadd.f32 0.0, %v1907
      %v1909 = vpop.f32.mrf.mxu0
      %v1910 = vadd.f32 0.0, %v1909
      %1911 = vdwg.mxu0
      %v1916 = vunpack.c.l.b16 %v1112
      %v1917 = vunpack.c.l.b16 %v1113
      %v1918 = vunpack.c.l.b16 %v1114
      %v1919 = vunpack.c.l.b16 %v1115
      %v1920 = vpack.c.b16 %v1917, %v1916
      %v1921 = vpack.c.b16 %v1919, %v1918
      %vm1922 = vcmask 719872
      %v1924 = vsel %vm1922, %v1920, 0
      %v1927 = vsel %vm1922, %v1921, 0
      %vm1929 = vcmask 1043456
      %v1931 = vsel %vm1929, %v1106, 0
      %v1934 = vsel %vm1929, %v1107, 0
      %1936 = vmatprep.subr.bf16.mxu0 0
      %1937 = vmatpush1.bf16.msra.mxu0 0
      %1938 = vmatprep.subr.bf16.mxu0 0
      %1939 = vmatpush1.bf16.msra.mxu0 0
      %1940 = vmatprep.subr.bf16.mxu0 %v1934
      %1941 = vmatpush1.bf16.msra.mxu0 %v1931
      %1942 = vmatprep.subr.bf16.mxu0 %v1105
      %1943 = vmatpush1.bf16.msra.mxu0 %v1104
      %1944 = vmatprep.subr.bf16.mxu0 %v1103
      %1945 = vmatpush1.bf16.msra.mxu0 %v1102
      %1946 = vmatprep.subr.bf16.mxu0 %v1101
      %1947 = vmatpush1.bf16.msra.mxu0 %v1100
      %1948 = vmatprep.subr.bf16.mxu0 %v1099
      %1949 = vmatpush1.bf16.msra.mxu0 %v1098
      %1950 = vmatprep.subr.bf16.mxu0 %v1097
      %1951 = vmatpush1.bf16.msra.mxu0 %v1096
      %1952 = vmatprep.subr.bf16.mxu0 0
      %1953 = vmatpush2.bf16.msra.mxu0 0
      %1954 = vmatprep.subr.bf16.mxu0 0
      %1955 = vmatpush2.bf16.msra.mxu0 0
      %1956 = vmatprep.subr.bf16.mxu0 0
      %1957 = vmatpush2.bf16.msra.mxu0 0
      %1958 = vmatprep.subr.bf16.mxu0 0
      %1959 = vmatpush2.bf16.msra.mxu0 0
      %1960 = vmatprep.subr.bf16.mxu0 0
      %1961 = vmatpush2.bf16.msra.mxu0 0
      %1962 = vmatprep.subr.bf16.mxu0 0
      %1963 = vmatpush2.bf16.msra.mxu0 0
      %1964 = vmatprep.subr.bf16.mxu0 0
      %1965 = vmatpush2.bf16.msra.mxu0 0
      %1966 = vmatprep.subr.bf16.mxu0 0
      %1967 = vmatpush2.bf16.msra.mxu0 0
      %1968 = vmatprep.mubr.bf16.mxu0 0
      %1969 = vmatmul.mubr.bf16.gmra.mxu0 %v1924
      %v1970 = vpop.f32.mrf.mxu0
      %v1971 = vadd.f32 %v1894, %v1970
      %v1972 = vpop.f32.mrf.mxu0
      %v1973 = vadd.f32 %v1896, %v1972
      %v1974 = vpop.f32.mrf.mxu0
      %v1975 = vadd.f32 %v1898, %v1974
      %v1976 = vpop.f32.mrf.mxu0
      %v1977 = vadd.f32 %v1900, %v1976
      %1978 = vmatprep.mubr.bf16.mxu0 0
      %1979 = vmatmul.mubr.bf16.gmra.mxu0 %v1927
      %v1980 = vpop.f32.mrf.mxu0
      %v1981 = vadd.f32 %v1904, %v1980
      %v1982 = vpop.f32.mrf.mxu0
      %v1983 = vadd.f32 %v1906, %v1982
      %v1984 = vpop.f32.mrf.mxu0
      %v1985 = vadd.f32 %v1908, %v1984
      %v1986 = vpop.f32.mrf.mxu0
      %v1987 = vadd.f32 %v1910, %v1986
      %1988 = vdwg.mxu0
      %v1989 = vld [vmem:[%s11] sm:$0xff]
      %v1990 = vld [vmem:[%s11 + $0x8] sm:$0xff]
      %v1991 = vld [vmem:[%s11 + $0x10] sm:$0xff]
      %v1992 = vld [vmem:[%s11 + $0x18] sm:$0xff]
      %1994 = vset.pattern.permute.xlu0 0
      %1995 = vperm.xlu0 %1994, %v1989
      %v1996 = vpop.permute.xlu0 %1995
      %1999 = vset.pattern.permute.xlu0 0
      %2000 = vperm.xlu0 %1999, %v1990
      %v2001 = vpop.permute.xlu0 %2000
      %2004 = vset.pattern.permute.xlu0 0
      %2005 = vperm.xlu0 %2004, %v1991
      %v2006 = vpop.permute.xlu0 %2005
      %2009 = vset.pattern.permute.xlu0 0
      %2010 = vperm.xlu0 %2009, %v1992
      %v2011 = vpop.permute.xlu0 %2010
      %v2013 = vadd.f32 %v1971, %v1996
      %v2014 = vadd.f32 %v1973, %v1996
      %v2015 = vadd.f32 %v1975, %v2001
      %v2016 = vadd.f32 %v1977, %v2001
      %v2017 = vadd.f32 %v1981, %v2006
      %v2018 = vadd.f32 %v1983, %v2006
      %v2019 = vadd.f32 %v1985, %v2011
      %v2020 = vadd.f32 %v1987, %v2011
      %v2021 = vmax.f32 %v2013, 0.0
      %v2022 = vmax.f32 %v2014, 0.0
      %v2023 = vmax.f32 %v2015, 0.0
      %v2024 = vmax.f32 %v2016, 0.0
      %v2025 = vmax.f32 %v2017, 0.0
      %v2026 = vmax.f32 %v2018, 0.0
      %v2027 = vmax.f32 %v2019, 0.0
      %v2028 = vmax.f32 %v2020, 0.0
      %v2029 = vpack.c.bf16 %v2023, %v2021
      %v2030 = vpack.c.bf16 %v2024, %v2022
      %v2031 = vpack.c.bf16 %v2027, %v2025
      %v2032 = vpack.c.bf16 %v2028, %v2026
      %v2033 = vld [vmem:[%s12] sm:$0x1]
      %v2034 = vld [vmem:[%s13] sm:$0x3]
      %2036 = vset.pattern.permute.xlu0 0
      %2037 = vperm.xlu0 %2036, %v2034
      %v2038 = vpop.permute.xlu0 %2037
      %v2041 = vsel %vm1208, %v2033, 0
      %2043 = vmatprep.subr.bf16.mxu0 0
      %2044 = vmatpush1.bf16.msra.mxu0 0
      %2045 = vmatprep.subr.bf16.mxu0 0
      %2046 = vmatpush1.bf16.msra.mxu0 0
      %2047 = vmatprep.subr.bf16.mxu0 0
      %2048 = vmatpush1.bf16.msra.mxu0 0
      %2049 = vmatprep.subr.bf16.mxu0 0
      %2050 = vmatpush1.bf16.msra.mxu0 0
      %2051 = vmatprep.subr.bf16.mxu0 0
      %2052 = vmatpush1.bf16.msra.mxu0 0
      %2053 = vmatprep.subr.bf16.mxu0 0
      %2054 = vmatpush1.bf16.msra.mxu0 0
      %2055 = vmatprep.subr.bf16.mxu0 %v2032
      %2056 = vmatpush1.bf16.msra.mxu0 %v2031
      %2057 = vmatprep.subr.bf16.mxu0 %v2030
      %2058 = vmatpush1.bf16.msra.mxu0 %v2029
      %2059 = vmatprep.subr.bf16.mxu0 0
      %2060 = vmatpush2.bf16.msra.mxu0 0
      %2061 = vmatprep.subr.bf16.mxu0 0
      %2062 = vmatpush2.bf16.msra.mxu0 0
      %2063 = vmatprep.subr.bf16.mxu0 0
      %2064 = vmatpush2.bf16.msra.mxu0 0
      %2065 = vmatprep.subr.bf16.mxu0 0
      %2066 = vmatpush2.bf16.msra.mxu0 0
      %2067 = vmatprep.subr.bf16.mxu0 0
      %2068 = vmatpush2.bf16.msra.mxu0 0
      %2069 = vmatprep.subr.bf16.mxu0 0
      %2070 = vmatpush2.bf16.msra.mxu0 0
      %2071 = vmatprep.subr.bf16.mxu0 0
      %2072 = vmatpush2.bf16.msra.mxu0 0
      %2073 = vmatprep.subr.bf16.mxu0 0
      %2074 = vmatpush2.bf16.msra.mxu0 0
      %2075 = vmatprep.mubr.bf16.mxu0 0
      %2076 = vmatmul.mubr.bf16.gmra.mxu0 %v2041
      %v2077 = vpop.f32.mrf.mxu0
      %v2078 = vadd.f32 %v2038, %v2077
      %v2079 = vpop.f32.mrf.mxu0
      %v2080 = vadd.f32 %v2038, %v2079
      %v2081 = vpop.f32.mrf.mxu0
      %v2082 = vpop.f32.mrf.mxu0
      %2083 = vdwg.mxu0
      %v2084 = vpack.c.bf16 %v2078, %v2078
      %v2085 = vpack.c.bf16 %v2080, %v2080
      %v2088 = vcombine.low %v2084, %v2085
      %v2090 = vunpack.c.l.s4 1966171168
      %v2091 = vunpack.c.0.s8 %v2090
      %v2092 = vlaneseq
      %v2093 = vshrl.u32 %v2092, 7
      %v2094 = vsub.s32 %v2091, %v2093
      %v2095 = vrot.slane %v2088, %v2094
      %v2097 = vunpack.c.l.s4 1966171168
      %v2098 = vunpack.c.0.s8 %v2097
      %v2099 = vlaneseq
      %v2100 = vshrl.u32 %v2099, 7
      %v2101 = vsub.s32 %v2098, %v2100
      %v2102 = vrot.slane %v2095, %v2101
      %2104 = vst [vmem:[%s525] sm:$0x3] %v2102
      %s2105 = smul.u32 2, %s29
      %p2106 = scmp.lt.s32.totalorder %s30, 2
      %s2107 = scalar_select %p2106, %s30, 2
      %p2108 = scmp.lt.s32.totalorder %s2105, 3
      %s2109 = scalar_select %p2108, %s2105, 3
      %s2110 = smul.addr %s2107, 4
      %s2111 = sadd.s32 %s2109, %s2110
      %s2112 = scalar_lea.vmem %s14, %s2111
      // Predicated region
      $region81: #{lstm_model_forward.1} parent=75 // pred_check
        %p2113 = pneg %p363
      $region82: #{lstm_model_forward.1} parent=75 // pred_check_branch
        %2115 = sbr.rel (%p2113) target = $region84
      $region83: #{lstm_model_forward.1} parent=75 // pred_region
        %s2116 = smul.u32 2, %s29
      $region84: #{lstm_model_forward.1} parent=75 // pred_fallthru
        _
    $region76: #{lstm_model_forward.1} parent=5 // pred_fallthru
      _
    %p2117 = scmp.le.s32.totalorder 2, %s20
    // Predicated region
    $region85: #{lstm_model_forward.1} parent=5 // pred_check
      %p2118 = pneg %p2117
    $region86: #{lstm_model_forward.1} parent=5 // pred_check_branch
      %2120 = sbr.rel (%p2118) target = $region88
    $region87: #{lstm_model_forward.1} parent=5 // pred_region
      %s2121 = ssub.s32 %s20, 2
      // Predicated region
      $region89: #{lstm_model_forward.1} parent=87 // pred_check
        %p2122 = pneg %p369
      $region90: #{lstm_model_forward.1} parent=87 // pred_check_branch
        %2124 = sbr.rel (%p2122) target = $region92
      $region91: #{lstm_model_forward.1} parent=87 // pred_region
        %s2125 = smul.u32 2, %s31
        %p2126 = scmp.lt.s32.totalorder %s32, 2
        %s2127 = scalar_select %p2126, %s32, 2
        %p2128 = scmp.lt.s32.totalorder %s2125, 3
        %s2129 = scalar_select %p2128, %s2125, 3
        %s2130 = smul.addr %s2127, 4
        %s2131 = sadd.s32 %s2129, %s2130
        %s2132 = scalar_lea.vmem %s14, %s2131
      $region92: #{lstm_model_forward.1} parent=87 // pred_fallthru
        _
    $region88: #{lstm_model_forward.1} parent=5 // pred_fallthru
      _
  $region6: #{lstm_model_forward.1} parent=0 // loop_footer
    %s24 = sadd.s32 1, %s20
  $region7: #{lstm_model_forward.1} parent=0 // loop_footer_branch
    %19 = sbr.rel target = $region3
  $region8: #{lstm_model_forward.1} parent=0 // loop_exit
    _

</llo_original>
